<compile_context>
chip_gen: v5e
topology: v5e:2x2
jax: 0.10.0
libtpu: 0.0.40
codegen_flags: <defaults>
</compile_context>

<pallas_src>
import functools

import jax
import jax.numpy as jnp
from jax import lax
from jax.experimental import pallas as pl
from jax.experimental.pallas import tpu as pltpu


# ---------------------------------------------------------------------------
# kernel
# ---------------------------------------------------------------------------
def _moe_kernel(ids_ref, na_ref,                                   # SMEM prefetch
                gate_ref, x_ref, w1_ref, b1_ref, w2_ref, b2_ref,   # inputs
                o_ref,                                             # output
                acc_ref,                                           # f32 scratch
                *, activation):
    bi = pl.program_id(0)    # token tile
    e = pl.program_id(1)     # compacted per-tile expert step
    kk = pl.program_id(2)    # d_hidden tile
    active = e < na_ref[bi]

    @pl.when((e == 0) & (kk == 0))
    def _init():
        acc_ref[...] = jnp.zeros_like(acc_ref)

    @pl.when(active)
    def _compute():
        x = x_ref[...]                                       # (Bt, dm)  bf16
        # h = act(x @ W1[e].T + b1[e]) ; W1 tile is (dh_t, dm), original layout
        h = lax.dot_general(x, w1_ref[0],
                            (((1,), (1,)), ((), ())),
                            preferred_element_type=jnp.float32)
        h = activation(h + b1_ref[0])                        # f32 elementwise
        h = h.astype(x.dtype)                                # bf16 into 2nd MXU
        # y_k = h_k @ W2[e][:, k-tile].T ; W2 tile is (dm, dh_t)
        y = lax.dot_general(h, w2_ref[0],
                            (((1,), (1,)), ((), ())),
                            preferred_element_type=jnp.float32)
        acc_ref[...] += gate_ref[0] * y                      # (Bt,1)*(Bt,dm)

        @pl.when(kk == 0)
        def _bias2():                                        # b2 once per expert
            acc_ref[...] += gate_ref[0] * b2_ref[0]

    @pl.when((e == pl.num_programs(1) - 1) & (kk == pl.num_programs(2) - 1))
    def _finalize():
        o_ref[...] = acc_ref[...].astype(o_ref.dtype)


# ---------------------------------------------------------------------------
# tiling / setup helpers
# ---------------------------------------------------------------------------
def _vmem_limit_bytes():
    try:
        cap = int(pltpu.get_tpu_info().vmem_capacity_bytes)   # 128 MiB v5e/v6e, 64 MiB v7x
    except Exception:
        cap = 64 << 20
    return int(min((cap * 3) // 4, 110 << 20))


def _num_tensorcores():
    try:
        return max(1, int(getattr(jax.devices()[0], "num_cores", 1)))
    except Exception:
        return 1


def _aligned_divisors(n, align):
    """Divisors of n that are multiples of align, descending; [n] if none."""
    divs = [d for d in range(align, n + 1, align) if n % d == 0]
    return sorted(divs, reverse=True) if divs else [n]


def _step_vmem_bytes(b_tile, dh_tile, d_model, compute_itemsize, out_itemsize):
    """Per-grid-step VMEM estimate (2x buffered blocks + scratch + temporaries)."""
    gate = b_tile * 128 * 4                         # (1,Bt,1) lane-padded to 128
    x = b_tile * d_model * compute_itemsize
    w1 = dh_tile * d_model * compute_itemsize
    b1 = 8 * max(dh_tile, 128) * 4
    w2 = d_model * dh_tile * compute_itemsize
    b2 = 8 * max(d_model, 128) * 4
    out = b_tile * d_model * out_itemsize
    acc = b_tile * d_model * 4
    tmp = b_tile * dh_tile * (4 + compute_itemsize) + b_tile * d_model * 4
    return 2 * (gate + x + w1 + b1 + w2 + b2 + out) + acc + tmp


def _select_tiles(B, d_model, d_hidden, compute_itemsize, out_itemsize,
                  vmem_budget, max_b_tile, max_dh_tile):
    b_align = 16 if B % 16 == 0 else (8 if B % 8 == 0 else 1)
    dh_align = 256 if d_hidden % 256 == 0 else (128 if d_hidden % 128 == 0
                                                else max(d_hidden, 1))
    b_cands = [t for t in _aligned_divisors(B, b_align) if t <= max_b_tile] or [B]
    dh_cands = [t for t in _aligned_divisors(d_hidden, dh_align)
                if t <= max_dh_tile] or [d_hidden]
    if _num_tensorcores() >= 2 and B >= 512:
        # keep both TensorCores busy on the "parallel" token-tile axis
        sub = [t for t in b_cands if 256 <= t <= B // 2]
        if sub:
            b_cands = sub
    for b_tile in b_cands:            # biggest b_tile first (arithmetic intensity)
        for dh_tile in dh_cands:      # then shrink dh_tile until the step fits VMEM
            if _step_vmem_bytes(b_tile, dh_tile, d_model,
                                compute_itemsize, out_itemsize) <= vmem_budget:
                return b_tile, dh_tile
    return b_cands[-1], dh_cands[-1]


def prepare_moe_weights(weight_htoh4, weight_h4toh, compute_dtype=jnp.bfloat16):
    """Cast expert weights to the MXU compute dtype ONCE at setup (avoids a
    per-call f32->bf16 convert of the entire expert-weight tensors)."""
    return (weight_htoh4.astype(compute_dtype),
            weight_h4toh.astype(compute_dtype))


# ---------------------------------------------------------------------------
# wrapper
# ---------------------------------------------------------------------------
def brute_force_moe_linear(inp, gate_idx, gate_score,
                           weight_htoh4, bias_htoh4, weight_h4toh, bias_h4toh,
                           activation=jax.nn.gelu,
                           compute_dtype=jnp.bfloat16,
                           max_b_tile=1024, max_dh_tile=1024):
    E, d_hidden, d_model = weight_htoh4.shape
    B, K = gate_idx.shape

    vmem_limit = _vmem_limit_bytes()
    out_itemsize = jnp.dtype(inp.dtype).itemsize
    compute_itemsize = jnp.dtype(compute_dtype).itemsize
    b_tile, dh_tile = _select_tiles(B, d_model, d_hidden,
                                    compute_itemsize, out_itemsize,
                                    int(vmem_limit * 0.85),
                                    max_b_tile, max_dh_tile)
    n_b = B // b_tile
    n_k = d_hidden // dh_tile
    last_k = n_k - 1
    # TODO(synk): pad B / d_model / d_hidden when not (16,128)/(8,128)-aligned at
    # production shapes; this wrapper relies on the full-dim exception.

    # ---- tiny routing glue (O(B*E)); weights are NOT transposed or copied ----
    onehot = jax.nn.one_hot(gate_idx, E, dtype=jnp.float32)             # (B,K,E)
    gate_dense = jnp.einsum('bk,bke->be', gate_score.astype(jnp.float32), onehot)
    gate_dense = jnp.transpose(gate_dense)[:, :, None]                  # (E,B,1)

    # per-token-tile compaction: each tile's active experts first (ascending)
    counts = onehot.reshape(n_b, b_tile * K, E).sum(axis=1)             # (n_b,E)
    active = counts > 0
    na = active.sum(axis=1).astype(jnp.int32)                           # (n_b,)
    ids = jnp.argsort(jnp.where(active, 0, E) + jnp.arange(E)[None, :],
                      axis=1).astype(jnp.int32)                         # (n_b,E)

    # MXU operands in bf16 (cast skipped if weights were prepared at setup);
    # biases / gate weights / elementwise math stay f32.
    w1 = (weight_htoh4 if weight_htoh4.dtype == compute_dtype
          else weight_htoh4.astype(compute_dtype))          # (E, dh, dm)
    w2 = (weight_h4toh if weight_h4toh.dtype == compute_dtype
          else weight_h4toh.astype(compute_dtype))          # (E, dm, dh)
    b1 = bias_htoh4.astype(jnp.float32)[:, None, :]         # (E, 1, dh)
    b2 = bias_h4toh.astype(jnp.float32)[:, None, :]         # (E, 1, dm)
    x = inp.astype(compute_dtype)

    def _expert_k(bi, e, kk, ids_ref, na_ref):
        # Steps past this tile's num-active map onto the SAME block as the last
        # real step, so Pallas skips their weight DMAs entirely.
        n_act = na_ref[bi]
        is_real = e < n_act
        slot = jnp.where(is_real, e, jnp.maximum(n_act - 1, 0))
        return ids_ref[bi, slot], jnp.where(is_real, kk, last_k)

    def gate_map(bi, e, kk, ids_ref, na_ref):
        ee, _ = _expert_k(bi, e, kk, ids_ref, na_ref)
        return (ee, bi, 0)

    def x_map(bi, e, kk, ids_ref, na_ref):
        return (bi, 0)

    def w1_map(bi, e, kk, ids_ref, na_ref):
        ee, kke = _expert_k(bi, e, kk, ids_ref, na_ref)
        return (ee, kke, 0)

    def b1_map(bi, e, kk, ids_ref, na_ref):
        ee, kke = _expert_k(bi, e, kk, ids_ref, na_ref)
        return (ee, 0, kke)

    def w2_map(bi, e, kk, ids_ref, na_ref):
        ee, kke = _expert_k(bi, e, kk, ids_ref, na_ref)
        return (ee, 0, kke)

    def b2_map(bi, e, kk, ids_ref, na_ref):
        ee, _ = _expert_k(bi, e, kk, ids_ref, na_ref)
        return (ee, 0, 0)

    def out_map(bi, e, kk, ids_ref, na_ref):
        return (bi, 0)

    kernel = functools.partial(_moe_kernel, activation=activation)

    # advisory cost estimate (upper bound; routing sparsity lowers the real cost)
    flops = 4 * B * d_model * d_hidden * min(E, 2 * K)
    bytes_accessed = (2 * E * d_model * d_hidden * compute_itemsize * n_b
                      + B * d_model * (compute_itemsize + out_itemsize)
                      + E * B * 4)

    # TODO(synk): on v7x, pipeline_mode=pl.Buffered(1) for x/out (their block
    # index changes only with bi) and accumulating straight into o_ref when
    # inp.dtype is f32 would free several MiB of VMEM for larger tiles.
    return pl.pallas_call(
        kernel,
        out_shape=jax.ShapeDtypeStruct((B, d_model), inp.dtype),
        grid_spec=pltpu.PrefetchScalarGridSpec(
            num_scalar_prefetch=2,
            grid=(n_b, E, n_k),
            in_specs=[
                pl.BlockSpec((1, b_tile, 1), gate_map),            # gate weights
                pl.BlockSpec((b_tile, d_model), x_map),            # tokens
                pl.BlockSpec((1, dh_tile, d_model), w1_map),       # W1[e] dh-tile
                pl.BlockSpec((1, 1, dh_tile), b1_map),             # b1[e] dh-tile
                pl.BlockSpec((1, d_model, dh_tile), w2_map),       # W2[e] dh-tile
                pl.BlockSpec((1, 1, d_model), b2_map),             # b2[e]
            ],
            out_specs=pl.BlockSpec((b_tile, d_model), out_map),
            scratch_shapes=[pltpu.VMEM((b_tile, d_model), jnp.float32)],
        ),
        compiler_params=pltpu.CompilerParams(
            dimension_semantics=("parallel", "arbitrary", "arbitrary"),
            vmem_limit_bytes=vmem_limit),
        cost_estimate=pl.CostEstimate(
            flops=int(flops),
            transcendentals=int(B * d_hidden * min(E, 2 * K)),
            bytes_accessed=int(bytes_accessed)),
    )(ids, na, gate_dense, x, w1, b1, w2, b2)


# ---------------------------------------------------------------------------
# pure-JAX reference (mirrors the PyTorch brute-force loop, all in f32)
# ---------------------------------------------------------------------------
def _reference(inp, gate_idx, gate_score, w1, b1, w2, b2, activation):
    B = inp.shape[0]
    h = jnp.einsum('bm,ehm->beh', inp, w1) + b1[None]      # (B, E, dh)
    h = activation(h)
    y = jnp.einsum('beh,emh->bem', h, w2) + b2[None]       # (B, E, dm)
    sel = y[jnp.arange(B)[:, None], gate_idx]              # (B, K, dm)
    return jnp.einsum('bk,bkm->bm', gate_score, sel)       # (B, dm)


if __name__ == "__main__":
    # small, MXU-aligned, forward-consistent shapes
    num_expert = 8
    world_size = 1
    d_model = 128
    d_hidden = 256
    top_k = 2
    batch = 16
    E = num_expert * world_size

    key = jax.random.PRNGKey(0)
    k_w1, k_b1, k_w2, k_b2, k_x, k_gi, k_gs = jax.random.split(key, 7)

    weight_htoh4 = 0.02 * jax.random.normal(k_w1, (E, d_hidden, d_model), jnp.float32)
    bias_htoh4 = 0.02 * jax.random.normal(k_b1, (E, d_hidden), jnp.float32)
    weight_h4toh = 0.02 * jax.random.normal(k_w2, (E, d_model, d_hidden), jnp.float32)
    bias_h4toh = 0.02 * jax.random.normal(k_b2, (E, d_model), jnp.float32)

    inp = jax.random.normal(k_x, (batch, d_model), jnp.float32)
    # route only to experts [0, 5) so the inactive-expert skip path is exercised
    gate_idx = jax.random.randint(k_gi, (batch, top_k), 0, 5, dtype=jnp.int32)
    gate_score = jax.nn.softmax(
        jax.random.normal(k_gs, (batch, top_k), jnp.float32), axis=-1)

    activation = jax.nn.gelu  # the PyTorch module takes `activation` as an arg

    # cast expert weights to the compute dtype ONCE (setup-time, not per call)
    w1_bf16, w2_bf16 = prepare_moe_weights(weight_htoh4, weight_h4toh)

    out = brute_force_moe_linear(inp, gate_idx, gate_score,
                                 w1_bf16, bias_htoh4,
                                 w2_bf16, bias_h4toh,
                                 activation=activation)
    out = jax.block_until_ready(out)

    ref = _reference(inp, gate_idx, gate_score,
                     weight_htoh4, bias_htoh4, weight_h4toh, bias_h4toh,
                     activation)
    assert out.shape == (batch, d_model)
    # bf16 MXU operands -> compare against f32 reference with bf16-level tolerance
    assert jnp.allclose(out, ref, atol=3e-3, rtol=3e-2), "mismatch vs reference"

    print("KERNEL_OK")
</pallas_src>

<mosaic_0001>
module attributes {stable_mosaic.version = 11 : i64} {
  func.func @_moe_kernel(%arg0: i32, %arg1: i32, %arg2: i32, %arg3: memref<1x8xi32, #tpu.memory_space<smem>>, %arg4: memref<1xi32, #tpu.memory_space<smem>>, %arg5: memref<1x16x1xf32, #tpu.memory_space<vmem>>, %arg6: memref<16x128xbf16, #tpu.memory_space<vmem>>, %arg7: memref<1x256x128xbf16, #tpu.memory_space<vmem>>, %arg8: memref<1x1x256xf32, #tpu.memory_space<vmem>>, %arg9: memref<1x128x256xbf16, #tpu.memory_space<vmem>>, %arg10: memref<1x1x128xf32, #tpu.memory_space<vmem>>, %arg11: memref<16x128xf32, #tpu.memory_space<vmem>>, %arg12: memref<16x128xf32, #tpu.memory_space<vmem>>) attributes {dimension_semantics = [#tpu.dimension_semantics<parallel>, #tpu.dimension_semantics<arbitrary>, #tpu.dimension_semantics<arbitrary>], iteration_bounds = array<i64: 1, 8, 1>, scalar_prefetch = 2 : i64, scratch_operands = 1 : i64, tpu.core_type = #tpu.core_type<tc>, window_params = [{transform_indices = @transform_0, window_bounds = array<i64: 1, 16, 1>}, {transform_indices = @transform_1, window_bounds = array<i64: 16, 128>}, {transform_indices = @transform_2, window_bounds = array<i64: 1, 256, 128>}, {transform_indices = @transform_3, window_bounds = array<i64: 1, 1, 256>}, {transform_indices = @transform_4, window_bounds = array<i64: 1, 128, 256>}, {transform_indices = @transform_5, window_bounds = array<i64: 1, 1, 128>}, {transform_indices = @transform_6, window_bounds = array<i64: 16, 128>}]} {
    %0 = arith.index_cast %arg0 : i32 to index
    %1 = memref.load %arg4[%0] : memref<1xi32, #tpu.memory_space<smem>>
    %2 = arith.cmpi slt, %arg1, %1 : i32
    %c0_i32 = arith.constant 0 : i32
    %3 = arith.cmpi eq, %arg1, %c0_i32 : i32
    %c0_i32_0 = arith.constant 0 : i32
    %4 = arith.cmpi eq, %arg2, %c0_i32_0 : i32
    %5 = arith.andi %3, %4 : i1
    %6 = arith.extui %5 : i1 to i32
    %c0_i32_1 = arith.constant 0 : i32
    %7 = arith.cmpi ne, %6, %c0_i32_1 : i32
    scf.if %7 {
      %cst = arith.constant 0.000000e+00 : f32
      %15 = vector.broadcast %cst : f32 to vector<16x128xf32>
      %c0 = arith.constant 0 : index
      %c0_5 = arith.constant 0 : index
      %16 = vector.load %arg12[%c0, %c0_5] : memref<16x128xf32, #tpu.memory_space<vmem>>, vector<16x128xf32>
      tpu.vector_store %arg12[%c0, %c0_5], %15 {strides = array<i32>} : memref<16x128xf32, #tpu.memory_space<vmem>>, vector<16x128xf32>,
    } else {
    }
    %8 = arith.extui %2 : i1 to i32
    %c0_i32_2 = arith.constant 0 : i32
    %9 = arith.cmpi ne, %8, %c0_i32_2 : i32
    scf.if %9 {
      %c0 = arith.constant 0 : index
      %c0_5 = arith.constant 0 : index
      %15 = vector.load %arg6[%c0, %c0_5] : memref<16x128xbf16, #tpu.memory_space<vmem>>, vector<16x128xbf16>
      %c0_6 = arith.constant 0 : index
      %c0_7 = arith.constant 0 : index
      %c0_8 = arith.constant 0 : index
      %16 = vector.load %arg7[%c0_6, %c0_7, %c0_8] : memref<1x256x128xbf16, #tpu.memory_space<vmem>>, vector<1x256x128xbf16>
      %17 = vector.shape_cast %16 : vector<1x256x128xbf16> to vector<256x128xbf16>
      %cst = arith.constant dense<0.000000e+00> : vector<16x256xf32>
      %18 = tpu.matmul %15, %17, %cst {dimension_numbers = #tpu.dot_dimension_numbers<[1], [1], [0], [0], [0, 0, 1, 0], [], []>} : vector<16x128xbf16>, vector<256x128xbf16>, vector<16x256xf32> -> vector<16x256xf32>
      %c0_9 = arith.constant 0 : index
      %c0_10 = arith.constant 0 : index
      %c0_11 = arith.constant 0 : index
      %19 = vector.load %arg8[%c0_9, %c0_10, %c0_11] : memref<1x1x256xf32, #tpu.memory_space<vmem>>, vector<1x1x256xf32>
      %20 = vector.shape_cast %19 : vector<1x1x256xf32> to vector<1x256xf32>
      %21 = vector.broadcast %20 : vector<1x256xf32> to vector<16x256xf32>
      %22 = arith.addf %18, %21 : vector<16x256xf32>
      %23 = arith.mulf %22, %22 : vector<16x256xf32>
      %24 = arith.mulf %22, %23 : vector<16x256xf32>
      %cst_12 = arith.constant 4.471500e-02 : f32
      %25 = vector.broadcast %cst_12 : f32 to vector<16x256xf32>
      %26 = arith.mulf %25, %24 : vector<16x256xf32>
      %27 = arith.addf %22, %26 : vector<16x256xf32>
      %cst_13 = arith.constant 0.797884583 : f32
      %28 = vector.broadcast %cst_13 : f32 to vector<16x256xf32>
      %29 = arith.mulf %28, %27 : vector<16x256xf32>
      %30 = math.tanh %29 : vector<16x256xf32>
      %cst_14 = arith.constant 1.000000e+00 : f32
      %31 = vector.broadcast %cst_14 : f32 to vector<16x256xf32>
      %32 = arith.addf %31, %30 : vector<16x256xf32>
      %cst_15 = arith.constant 5.000000e-01 : f32
      %33 = vector.broadcast %cst_15 : f32 to vector<16x256xf32>
      %34 = arith.mulf %33, %32 : vector<16x256xf32>
      %35 = arith.mulf %22, %34 : vector<16x256xf32>
      %36 = arith.truncf %35 : vector<16x256xf32> to vector<16x256xbf16>
      %c0_16 = arith.constant 0 : index
      %c0_17 = arith.constant 0 : index
      %c0_18 = arith.constant 0 : index
      %37 = vector.load %arg9[%c0_16, %c0_17, %c0_18] : memref<1x128x256xbf16, #tpu.memory_space<vmem>>, vector<1x128x256xbf16>
      %38 = vector.shape_cast %37 : vector<1x128x256xbf16> to vector<128x256xbf16>
      %cst_19 = arith.constant dense<0.000000e+00> : vector<16x128xf32>
      %39 = tpu.matmul %36, %38, %cst_19 {dimension_numbers = #tpu.dot_dimension_numbers<[1], [1], [0], [0], [0, 0, 1, 0], [], []>} : vector<16x256xbf16>, vector<128x256xbf16>, vector<16x128xf32> -> vector<16x128xf32>
      %c0_20 = arith.constant 0 : index
      %c0_21 = arith.constant 0 : index
      %40 = vector.load %arg12[%c0_20, %c0_21] : memref<16x128xf32, #tpu.memory_space<vmem>>, vector<16x128xf32>
      %c0_22 = arith.constant 0 : index
      %c0_23 = arith.constant 0 : index
      %c0_24 = arith.constant 0 : index
      %41 = vector.load %arg5[%c0_22, %c0_23, %c0_24] : memref<1x16x1xf32, #tpu.memory_space<vmem>>, vector<1x16x1xf32>
      %42 = vector.shape_cast %41 : vector<1x16x1xf32> to vector<16x1xf32>
      %43 = vector.broadcast %42 : vector<16x1xf32> to vector<16x128xf32>
      %44 = arith.mulf %43, %39 : vector<16x128xf32>
      %45 = arith.addf %40, %44 : vector<16x128xf32>
      %c0_25 = arith.constant 0 : index
      %c0_26 = arith.constant 0 : index
      %46 = vector.load %arg12[%c0_25, %c0_26] : memref<16x128xf32, #tpu.memory_space<vmem>>, vector<16x128xf32>
      tpu.vector_store %arg12[%c0_25, %c0_26], %45 {strides = array<i32>} : memref<16x128xf32, #tpu.memory_space<vmem>>, vector<16x128xf32>,
      %c0_i32_27 = arith.constant 0 : i32
      %47 = arith.cmpi eq, %arg2, %c0_i32_27 : i32
      %48 = arith.extui %47 : i1 to i32
      %c0_i32_28 = arith.constant 0 : i32
      %49 = arith.cmpi ne, %48, %c0_i32_28 : i32
      scf.if %49 {
        %c0_29 = arith.constant 0 : index
        %c0_30 = arith.constant 0 : index
        %50 = vector.load %arg12[%c0_29, %c0_30] : memref<16x128xf32, #tpu.memory_space<vmem>>, vector<16x128xf32>
        %c0_31 = arith.constant 0 : index
        %c0_32 = arith.constant 0 : index
        %c0_33 = arith.constant 0 : index
        %51 = vector.load %arg5[%c0_31, %c0_32, %c0_33] : memref<1x16x1xf32, #tpu.memory_space<vmem>>, vector<1x16x1xf32>
        %52 = vector.shape_cast %51 : vector<1x16x1xf32> to vector<16x1xf32>
        %c0_34 = arith.constant 0 : index
        %c0_35 = arith.constant 0 : index
        %c0_36 = arith.constant 0 : index
        %53 = vector.load %arg10[%c0_34, %c0_35, %c0_36] : memref<1x1x128xf32, #tpu.memory_space<vmem>>, vector<1x1x128xf32>
        %54 = vector.shape_cast %53 : vector<1x1x128xf32> to vector<1x128xf32>
        %55 = vector.broadcast %52 : vector<16x1xf32> to vector<16x128xf32>
        %56 = vector.broadcast %54 : vector<1x128xf32> to vector<16x128xf32>
        %57 = arith.mulf %55, %56 : vector<16x128xf32>
        %58 = arith.addf %50, %57 : vector<16x128xf32>
        %c0_37 = arith.constant 0 : index
        %c0_38 = arith.constant 0 : index
        %59 = vector.load %arg12[%c0_37, %c0_38] : memref<16x128xf32, #tpu.memory_space<vmem>>, vector<16x128xf32>
        tpu.vector_store %arg12[%c0_37, %c0_38], %58 {strides = array<i32>} : memref<16x128xf32, #tpu.memory_space<vmem>>, vector<16x128xf32>,
      } else {
      }
    } else {
    }
    %c7_i32 = arith.constant 7 : i32
    %10 = arith.cmpi eq, %arg1, %c7_i32 : i32
    %c0_i32_3 = arith.constant 0 : i32
    %11 = arith.cmpi eq, %arg2, %c0_i32_3 : i32
    %12 = arith.andi %10, %11 : i1
    %13 = arith.extui %12 : i1 to i32
    %c0_i32_4 = arith.constant 0 : i32
    %14 = arith.cmpi ne, %13, %c0_i32_4 : i32
    scf.if %14 {
      %c0 = arith.constant 0 : index
      %c0_5 = arith.constant 0 : index
      %15 = vector.load %arg12[%c0, %c0_5] : memref<16x128xf32, #tpu.memory_space<vmem>>, vector<16x128xf32>
      %c0_6 = arith.constant 0 : index
      %c0_7 = arith.constant 0 : index
      %16 = vector.load %arg11[%c0_6, %c0_7] : memref<16x128xf32, #tpu.memory_space<vmem>>, vector<16x128xf32>
      tpu.vector_store %arg11[%c0_6, %c0_7], %15 {strides = array<i32>} : memref<16x128xf32, #tpu.memory_space<vmem>>, vector<16x128xf32>,
    } else {
    }
    return
  }
  func.func @transform_0(%arg0: i32, %arg1: i32, %arg2: i32, %arg3: memref<1x8xi32, #tpu.memory_space<smem>>, %arg4: memref<1xi32, #tpu.memory_space<smem>>) -> (i32, i32, i32) {
    %0 = arith.index_cast %arg0 : i32 to index
    %1 = memref.load %arg4[%0] : memref<1xi32, #tpu.memory_space<smem>>
    %2 = arith.cmpi slt, %arg1, %1 : i32
    %c1_i32 = arith.constant 1 : i32
    %3 = arith.subi %1, %c1_i32 : i32
    %c0_i32 = arith.constant 0 : i32
    %4 = arith.maxsi %3, %c0_i32 : i32
    %5 = arith.select %2, %arg1, %4 : i32
    %6 = arith.index_cast %arg0 : i32 to index
    %7 = arith.index_cast %5 : i32 to index
    %8 = memref.load %arg3[%6, %7] : memref<1x8xi32, #tpu.memory_space<smem>>
    %c0_i32_0 = arith.constant 0 : i32
    %9 = arith.select %2, %arg2, %c0_i32_0 : i32
    %c0_i32_1 = arith.constant 0 : i32
    %c0_i32_2 = arith.constant 0 : i32
    return %8, %arg0, %c0_i32_1 : i32, i32, i32
  }
  func.func @transform_1(%arg0: i32, %arg1: i32, %arg2: i32, %arg3: memref<1x8xi32, #tpu.memory_space<smem>>, %arg4: memref<1xi32, #tpu.memory_space<smem>>) -> (i32, i32) {
    %c0_i32 = arith.constant 0 : i32
    %c0_i32_0 = arith.constant 0 : i32
    return %arg0, %c0_i32 : i32, i32
  }
  func.func @transform_2(%arg0: i32, %arg1: i32, %arg2: i32, %arg3: memref<1x8xi32, #tpu.memory_space<smem>>, %arg4: memref<1xi32, #tpu.memory_space<smem>>) -> (i32, i32, i32) {
    %0 = arith.index_cast %arg0 : i32 to index
    %1 = memref.load %arg4[%0] : memref<1xi32, #tpu.memory_space<smem>>
    %2 = arith.cmpi slt, %arg1, %1 : i32
    %c1_i32 = arith.constant 1 : i32
    %3 = arith.subi %1, %c1_i32 : i32
    %c0_i32 = arith.constant 0 : i32
    %4 = arith.maxsi %3, %c0_i32 : i32
    %5 = arith.select %2, %arg1, %4 : i32
    %6 = arith.index_cast %arg0 : i32 to index
    %7 = arith.index_cast %5 : i32 to index
    %8 = memref.load %arg3[%6, %7] : memref<1x8xi32, #tpu.memory_space<smem>>
    %c0_i32_0 = arith.constant 0 : i32
    %9 = arith.select %2, %arg2, %c0_i32_0 : i32
    %c0_i32_1 = arith.constant 0 : i32
    %c0_i32_2 = arith.constant 0 : i32
    return %8, %9, %c0_i32_1 : i32, i32, i32
  }
  func.func @transform_3(%arg0: i32, %arg1: i32, %arg2: i32, %arg3: memref<1x8xi32, #tpu.memory_space<smem>>, %arg4: memref<1xi32, #tpu.memory_space<smem>>) -> (i32, i32, i32) {
    %0 = arith.index_cast %arg0 : i32 to index
    %1 = memref.load %arg4[%0] : memref<1xi32, #tpu.memory_space<smem>>
    %2 = arith.cmpi slt, %arg1, %1 : i32
    %c1_i32 = arith.constant 1 : i32
    %3 = arith.subi %1, %c1_i32 : i32
    %c0_i32 = arith.constant 0 : i32
    %4 = arith.maxsi %3, %c0_i32 : i32
    %5 = arith.select %2, %arg1, %4 : i32
    %6 = arith.index_cast %arg0 : i32 to index
    %7 = arith.index_cast %5 : i32 to index
    %8 = memref.load %arg3[%6, %7] : memref<1x8xi32, #tpu.memory_space<smem>>
    %c0_i32_0 = arith.constant 0 : i32
    %9 = arith.select %2, %arg2, %c0_i32_0 : i32
    %c0_i32_1 = arith.constant 0 : i32
    %c0_i32_2 = arith.constant 0 : i32
    return %8, %c0_i32_1, %9 : i32, i32, i32
  }
  func.func @transform_4(%arg0: i32, %arg1: i32, %arg2: i32, %arg3: memref<1x8xi32, #tpu.memory_space<smem>>, %arg4: memref<1xi32, #tpu.memory_space<smem>>) -> (i32, i32, i32) {
    %0 = arith.index_cast %arg0 : i32 to index
    %1 = memref.load %arg4[%0] : memref<1xi32, #tpu.memory_space<smem>>
    %2 = arith.cmpi slt, %arg1, %1 : i32
    %c1_i32 = arith.constant 1 : i32
    %3 = arith.subi %1, %c1_i32 : i32
    %c0_i32 = arith.constant 0 : i32
    %4 = arith.maxsi %3, %c0_i32 : i32
    %5 = arith.select %2, %arg1, %4 : i32
    %6 = arith.index_cast %arg0 : i32 to index
    %7 = arith.index_cast %5 : i32 to index
    %8 = memref.load %arg3[%6, %7] : memref<1x8xi32, #tpu.memory_space<smem>>
    %c0_i32_0 = arith.constant 0 : i32
    %9 = arith.select %2, %arg2, %c0_i32_0 : i32
    %c0_i32_1 = arith.constant 0 : i32
    %c0_i32_2 = arith.constant 0 : i32
    return %8, %c0_i32_1, %9 : i32, i32, i32
  }
  func.func @transform_5(%arg0: i32, %arg1: i32, %arg2: i32, %arg3: memref<1x8xi32, #tpu.memory_space<smem>>, %arg4: memref<1xi32, #tpu.memory_space<smem>>) -> (i32, i32, i32) {
    %0 = arith.index_cast %arg0 : i32 to index
    %1 = memref.load %arg4[%0] : memref<1xi32, #tpu.memory_space<smem>>
    %2 = arith.cmpi slt, %arg1, %1 : i32
    %c1_i32 = arith.constant 1 : i32
    %3 = arith.subi %1, %c1_i32 : i32
    %c0_i32 = arith.constant 0 : i32
    %4 = arith.maxsi %3, %c0_i32 : i32
    %5 = arith.select %2, %arg1, %4 : i32
    %6 = arith.index_cast %arg0 : i32 to index
    %7 = arith.index_cast %5 : i32 to index
    %8 = memref.load %arg3[%6, %7] : memref<1x8xi32, #tpu.memory_space<smem>>
    %c0_i32_0 = arith.constant 0 : i32
    %9 = arith.select %2, %arg2, %c0_i32_0 : i32
    %c0_i32_1 = arith.constant 0 : i32
    %c0_i32_2 = arith.constant 0 : i32
    %c0_i32_3 = arith.constant 0 : i32
    return %8, %c0_i32_1, %c0_i32_2 : i32, i32, i32
  }
  func.func @transform_6(%arg0: i32, %arg1: i32, %arg2: i32, %arg3: memref<1x8xi32, #tpu.memory_space<smem>>, %arg4: memref<1xi32, #tpu.memory_space<smem>>) -> (i32, i32) {
    %c0_i32 = arith.constant 0 : i32
    %c0_i32_0 = arith.constant 0 : i32
    return %arg0, %c0_i32 : i32, i32
  }
}

</mosaic_0001>

<llo_original>
// kernel: tpu_custom_call.1
$region0: #{tpu_custom_call.1}
  #allocation0 [shape = 'u32[]', space=smem, size = 0x4, offset = 0x4, fixed_abs, tag = 'smem constant byte address 0x4 - core index']
  #allocation1 [shape = 'u32[72,128]{1,0:T(1,128)}', space=vmem, size = 0x9000, scoped, tag = 'internal scratch']
  #allocation2 [shape = 'f32[16,128]{1,0:T(8,128)}', space=vmem, size = 0x2000, scoped, tag = 'scratch operand']
  #allocation3 [shape = 's32[1]{0}', space=sflag, size = 0x4, scoped, tag = 'scoped memory for tpu_custom_call.1']
  #allocation4 [shape = 'u8[512]{0}', space=smem, size = 0x200, scoped, tag = 'prefetched SMEM operand 0']
  #allocation5 [shape = 's32[1]{0:T(128)S(6)}', space=smem, size = 0x200, scoped, tag = 'prefetched SMEM operand 1']
  %s0 = inlined_call_operand.vmem [shape: s32[1,8], index: 0, kind: input, shape index: {}]
  %s1 = inlined_call_operand.<no memory space> [shape: s32[1], index: 1, kind: input, shape index: {}]
  %s2 = inlined_call_operand.vmem [shape: f32[8,16,1], index: 2, kind: input, shape index: {}]
  %s3 = inlined_call_operand.vmem [shape: bf16[16,128], index: 3, kind: input, shape index: {}]
  %s4 = inlined_call_operand.hbm [shape: bf16[8,256,128], index: 4, kind: input, shape index: {}]
  %s5 = inlined_call_operand.vmem [shape: f32[8,1,256], index: 5, kind: input, shape index: {}]
  %s6 = inlined_call_operand.hbm [shape: bf16[8,128,256], index: 6, kind: input, shape index: {}]
  %s7 = inlined_call_operand.vmem [shape: f32[8,1,128], index: 7, kind: input, shape index: {}]
  %s8 = inlined_call_operand.hbm [shape: f32[16,128], index: 8, kind: output, shape index: {}]
  %s9 = sld [smem:[#allocation0]]
  $region81: #{tpu_custom_call.1} parent=0
    _
  %s11 = ssub.s32 1, %s9
  %s12 = scalar_select 0, %s11, %s9
  %s14 = sshll.u32 %s0, 4
  %s15 = int_to_ptr.vmem [resolvable:$true] %s14
  %17 = dma.vmem_to_smem %s15, 16, [#allocation4], [#allocation3]
  %18 = sst [smem:[#allocation5]] %s1
  %20 = dma.done [#allocation3], 16
  %21 = sfence
  $region1: #{tpu_custom_call.1} parent=0
    #allocation6 [shape = 'u8[131072]{0}', space=vmem, size = 0x20000, scoped, tag = 'input window, operand 4']
    #allocation7 [shape = 's32[2]{0}', space=sflag, size = 0x8, scoped, tag = 'scoped memory for tpu_custom_call.1']
    #allocation8 [shape = 's32[2]{0}', space=sflag, size = 0x8, scoped, tag = 'scoped memory for tpu_custom_call.1']
    #allocation9 [shape = 'u8[131072]{0}', space=vmem, size = 0x20000, scoped, tag = 'input window, operand 6']
    #allocation10 [shape = 's32[2]{0}', space=sflag, size = 0x8, scoped, tag = 'scoped memory for tpu_custom_call.1']
    #allocation11 [shape = 'u8[8192]{0}', space=vmem, size = 0x2000, scoped, tag = 'output window, operand 0, single buffered']
    %22 = vsyncpa [#allocation7], 0
    %s23 = scalar_lea.sflag [#allocation7], 1
    %24 = vsyncpa %s23, 0
    %25 = vsyncpa [#allocation10], 0
    %s26 = scalar_lea.sflag [#allocation10], 1
    %27 = vsyncpa %s26, 0
    %28 = vsyncpa [#allocation8], 0
    loop: start=0, step=1, limit=10
    $region2: #{tpu_custom_call.1} parent=1 // loop_pre_header
      _
    $region3: #{tpu_custom_call.1} parent=1 // loop_header
      %s30 = sphi 0, %s34
      %p31 = scmp.ge.s32.totalorder %s30, 10
      %s37 = sphi 0, %s56
      %s38 = sphi 0, %s52
      %s39 = sphi 0, %s48
      %s40 = sphi 0, %s37
      %s41 = sphi 0, %s38
      %s42 = sphi 0, %s39
      %s43 = sphi 0, %s40
      %s44 = sphi 0, %s41
      %s45 = sphi 0, %s42
      %s89 = sphi 0, %s91
      %s92 = sphi 0, %s89
      %s93 = sphi 0, %s92
      %s109 = sphi 0, %s93
      %s115 = sphi 0, %s117
      %s118 = sphi 0, %s115
      %s119 = sphi 0, %s118
      %s135 = sphi 0, %s119
      %s173 = sphi 0, %s175
      %s176 = sphi 0, %s173
      %s177 = sphi 0, %s176
      %s193 = sphi 0, %s177
      %s231 = sphi 0, %s233
      %s234 = sphi 0, %s231
      %s235 = sphi 0, %s234
      %s251 = sphi 0, %s235
      %s289 = sphi 0, %s291
      %s292 = sphi 0, %s289
      %s293 = sphi 0, %s292
      %s309 = sphi 0, %s293
      %s343 = sphi 0, %s345
      %s346 = sphi 0, %s343
      %s347 = sphi 0, %s346
      %s363 = sphi 0, %s347
      %s369 = sphi 0, %s371
      %s372 = sphi 0, %s369
      %s373 = sphi 0, %s372
      %s389 = sphi 0, %s373
    $region4: #{tpu_custom_call.1} parent=1 // loop_header_branch
      %33 = sbr.rel (%p31) target = $region8
    $region5: #{tpu_custom_call.1} parent=1 // loop_body
      %s35 = ssub.s32 %s30, 1
      %s36 = ssub.s32 %s30, 2
      %s46 = sadd.s32 1, %s39
      %p47 = scmp.ge.s32.totalorder %s46, 1
      %s48 = scalar_select %p47, 0, %s46
      %s49 = sadd.s32 1, %s38
      %s50 = scalar_select %p47, %s49, %s38
      %p51 = scmp.ge.s32.totalorder %s50, 8
      %s52 = scalar_select %p51, 0, %s50
      %s53 = sadd.s32 1, %s37
      %s54 = scalar_select %p51, %s53, %s37
      %p55 = scmp.ge.s32.totalorder %s54, 1
      %s56 = scalar_select %p55, 0, %s54
      %s57 = sld [smem:[#allocation5 + %s37]]
      %p58 = scmp.lt.s32.totalorder %s38, %s57
      %s59 = ssub.s32 %s57, 1
      %p60 = scmp.gt.s32.totalorder %s59, 0
      %s61 = scalar_select %p60, %s59, 0
      %s62 = scalar_select %p58, %s38, %s61
      %s63 = sshra.s32 %s62, 7
      %s64 = sand.u32 %s62, 127
      %s65 = sadd.s32 %s63, %s37
      %s66 = smul.u32 %s65, 128
      %s67 = sshra.s32 %s62, 7
      %s68 = sand.u32 %s62, 127
      %s69 = sadd.s32 %s66, %s68
      %s70 = sld [smem:[#allocation4 + %s69]]
      %s71 = sld [smem:[#allocation5 + %s56]]
      %p72 = scmp.lt.s32.totalorder %s52, %s71
      %s73 = ssub.s32 %s71, 1
      %p74 = scmp.gt.s32.totalorder %s73, 0
      %s75 = scalar_select %p74, %s73, 0
      %s76 = scalar_select %p72, %s52, %s75
      %s77 = sshra.s32 %s76, 7
      %s78 = sand.u32 %s76, 127
      %s79 = sadd.s32 %s77, %s56
      %s80 = smul.u32 %s79, 128
      %s81 = sshra.s32 %s76, 7
      %s82 = sand.u32 %s76, 127
      %s83 = sadd.s32 %s80, %s82
      %s84 = sld [smem:[#allocation4 + %s83]]
      %s85 = ssub.s32 %s70, %s84
      %s86 = ssub.s32 %s37, %s56
      %s87 = sor.u32 %s85, %s86
      %p88 = scmp.eq.s32.totalorder %s87, 0
      %s90 = sadd.s32 %s89, 1
      %s91 = scalar_select %p88, %s89, %s90
      %p94 = pneg %p88
      %p95 = scmp.eq.s32.totalorder %s30, 7
      %p96 = por %p94, %p95
      %p97 = scmp.ne.s32.totalorder %s89, %s92
      %p98 = scmp.eq.s32.totalorder %s30, 0
      %p99 = por %p97, %p98
      %p100 = scmp.ne.s32.totalorder %s89, %s92
      %p101 = scmp.eq.s32.totalorder %s35, 7
      %p102 = por %p100, %p101
      %p103 = scmp.ne.s32.totalorder %s92, %s93
      %p104 = scmp.eq.s32.totalorder %s35, 0
      %p105 = por %p103, %p104
      %p106 = scmp.ne.s32.totalorder %s92, %s93
      %p107 = scmp.eq.s32.totalorder %s36, 7
      %p108 = por %p106, %p107
      %p110 = scmp.ne.s32.totalorder %s93, %s109
      %p111 = scmp.eq.s32.totalorder %s36, 0
      %p112 = por %p110, %p111
      %s113 = ssub.s32 %s37, %s56
      %p114 = scmp.eq.s32.totalorder %s113, 0
      %s116 = sadd.s32 %s115, 1
      %s117 = scalar_select %p114, %s115, %s116
      %p120 = pneg %p114
      %p121 = scmp.eq.s32.totalorder %s30, 7
      %p122 = por %p120, %p121
      %p123 = scmp.ne.s32.totalorder %s115, %s118
      %p124 = scmp.eq.s32.totalorder %s30, 0
      %p125 = por %p123, %p124
      %p126 = scmp.ne.s32.totalorder %s115, %s118
      %p127 = scmp.eq.s32.totalorder %s35, 7
      %p128 = por %p126, %p127
      %p129 = scmp.ne.s32.totalorder %s118, %s119
      %p130 = scmp.eq.s32.totalorder %s35, 0
      %p131 = por %p129, %p130
      %p132 = scmp.ne.s32.totalorder %s118, %s119
      %p133 = scmp.eq.s32.totalorder %s36, 7
      %p134 = por %p132, %p133
      %p136 = scmp.ne.s32.totalorder %s119, %s135
      %p137 = scmp.eq.s32.totalorder %s36, 0
      %p138 = por %p136, %p137
      %s139 = sld [smem:[#allocation5 + %s37]]
      %p140 = scmp.lt.s32.totalorder %s38, %s139
      %s141 = ssub.s32 %s139, 1
      %p142 = scmp.gt.s32.totalorder %s141, 0
      %s143 = scalar_select %p142, %s141, 0
      %s144 = scalar_select %p140, %s38, %s143
      %s145 = sshra.s32 %s144, 7
      %s146 = sand.u32 %s144, 127
      %s147 = sadd.s32 %s145, %s37
      %s148 = smul.u32 %s147, 128
      %s149 = sshra.s32 %s144, 7
      %s150 = sand.u32 %s144, 127
      %s151 = sadd.s32 %s148, %s150
      %s152 = sld [smem:[#allocation4 + %s151]]
      %s153 = scalar_select %p140, %s39, 0
      %s154 = sld [smem:[#allocation5 + %s56]]
      %p155 = scmp.lt.s32.totalorder %s52, %s154
      %s156 = ssub.s32 %s154, 1
      %p157 = scmp.gt.s32.totalorder %s156, 0
      %s158 = scalar_select %p157, %s156, 0
      %s159 = scalar_select %p155, %s52, %s158
      %s160 = sshra.s32 %s159, 7
      %s161 = sand.u32 %s159, 127
      %s162 = sadd.s32 %s160, %s56
      %s163 = smul.u32 %s162, 128
      %s164 = sshra.s32 %s159, 7
      %s165 = sand.u32 %s159, 127
      %s166 = sadd.s32 %s163, %s165
      %s167 = sld [smem:[#allocation4 + %s166]]
      %s168 = scalar_select %p155, %s48, 0
      %s169 = ssub.s32 %s152, %s167
      %s170 = ssub.s32 %s153, %s168
      %s171 = sor.u32 %s169, %s170
      %p172 = scmp.eq.s32.totalorder %s171, 0
      %s174 = sadd.s32 %s173, 1
      %s175 = scalar_select %p172, %s173, %s174
      %p178 = pneg %p172
      %p179 = scmp.eq.s32.totalorder %s30, 7
      %p180 = por %p178, %p179
      %p181 = scmp.ne.s32.totalorder %s173, %s176
      %p182 = scmp.eq.s32.totalorder %s30, 0
      %p183 = por %p181, %p182
      %p184 = scmp.ne.s32.totalorder %s173, %s176
      %p185 = scmp.eq.s32.totalorder %s35, 7
      %p186 = por %p184, %p185
      %p187 = scmp.ne.s32.totalorder %s176, %s177
      %p188 = scmp.eq.s32.totalorder %s35, 0
      %p189 = por %p187, %p188
      %p190 = scmp.ne.s32.totalorder %s176, %s177
      %p191 = scmp.eq.s32.totalorder %s36, 7
      %p192 = por %p190, %p191
      %p194 = scmp.ne.s32.totalorder %s177, %s193
      %p195 = scmp.eq.s32.totalorder %s36, 0
      %p196 = por %p194, %p195
      %s197 = sld [smem:[#allocation5 + %s37]]
      %p198 = scmp.lt.s32.totalorder %s38, %s197
      %s199 = ssub.s32 %s197, 1
      %p200 = scmp.gt.s32.totalorder %s199, 0
      %s201 = scalar_select %p200, %s199, 0
      %s202 = scalar_select %p198, %s38, %s201
      %s203 = sshra.s32 %s202, 7
      %s204 = sand.u32 %s202, 127
      %s205 = sadd.s32 %s203, %s37
      %s206 = smul.u32 %s205, 128
      %s207 = sshra.s32 %s202, 7
      %s208 = sand.u32 %s202, 127
      %s209 = sadd.s32 %s206, %s208
      %s210 = sld [smem:[#allocation4 + %s209]]
      %s211 = scalar_select %p198, %s39, 0
      %s212 = sld [smem:[#allocation5 + %s56]]
      %p213 = scmp.lt.s32.totalorder %s52, %s212
      %s214 = ssub.s32 %s212, 1
      %p215 = scmp.gt.s32.totalorder %s214, 0
      %s216 = scalar_select %p215, %s214, 0
      %s217 = scalar_select %p213, %s52, %s216
      %s218 = sshra.s32 %s217, 7
      %s219 = sand.u32 %s217, 127
      %s220 = sadd.s32 %s218, %s56
      %s221 = smul.u32 %s220, 128
      %s222 = sshra.s32 %s217, 7
      %s223 = sand.u32 %s217, 127
      %s224 = sadd.s32 %s221, %s223
      %s225 = sld [smem:[#allocation4 + %s224]]
      %s226 = scalar_select %p213, %s48, 0
      %s227 = ssub.s32 %s210, %s225
      %s228 = ssub.s32 %s211, %s226
      %s229 = sor.u32 %s227, %s228
      %p230 = scmp.eq.s32.totalorder %s229, 0
      %s232 = sadd.s32 %s231, 1
      %s233 = scalar_select %p230, %s231, %s232
      %p236 = pneg %p230
      %p237 = scmp.eq.s32.totalorder %s30, 7
      %p238 = por %p236, %p237
      %p239 = scmp.ne.s32.totalorder %s231, %s234
      %p240 = scmp.eq.s32.totalorder %s30, 0
      %p241 = por %p239, %p240
      %p242 = scmp.ne.s32.totalorder %s231, %s234
      %p243 = scmp.eq.s32.totalorder %s35, 7
      %p244 = por %p242, %p243
      %p245 = scmp.ne.s32.totalorder %s234, %s235
      %p246 = scmp.eq.s32.totalorder %s35, 0
      %p247 = por %p245, %p246
      %p248 = scmp.ne.s32.totalorder %s234, %s235
      %p249 = scmp.eq.s32.totalorder %s36, 7
      %p250 = por %p248, %p249
      %p252 = scmp.ne.s32.totalorder %s235, %s251
      %p253 = scmp.eq.s32.totalorder %s36, 0
      %p254 = por %p252, %p253
      %s255 = sld [smem:[#allocation5 + %s37]]
      %p256 = scmp.lt.s32.totalorder %s38, %s255
      %s257 = ssub.s32 %s255, 1
      %p258 = scmp.gt.s32.totalorder %s257, 0
      %s259 = scalar_select %p258, %s257, 0
      %s260 = scalar_select %p256, %s38, %s259
      %s261 = sshra.s32 %s260, 7
      %s262 = sand.u32 %s260, 127
      %s263 = sadd.s32 %s261, %s37
      %s264 = smul.u32 %s263, 128
      %s265 = sshra.s32 %s260, 7
      %s266 = sand.u32 %s260, 127
      %s267 = sadd.s32 %s264, %s266
      %s268 = sld [smem:[#allocation4 + %s267]]
      %s269 = scalar_select %p256, %s39, 0
      %s270 = sld [smem:[#allocation5 + %s56]]
      %p271 = scmp.lt.s32.totalorder %s52, %s270
      %s272 = ssub.s32 %s270, 1
      %p273 = scmp.gt.s32.totalorder %s272, 0
      %s274 = scalar_select %p273, %s272, 0
      %s275 = scalar_select %p271, %s52, %s274
      %s276 = sshra.s32 %s275, 7
      %s277 = sand.u32 %s275, 127
      %s278 = sadd.s32 %s276, %s56
      %s279 = smul.u32 %s278, 128
      %s280 = sshra.s32 %s275, 7
      %s281 = sand.u32 %s275, 127
      %s282 = sadd.s32 %s279, %s281
      %s283 = sld [smem:[#allocation4 + %s282]]
      %s284 = scalar_select %p271, %s48, 0
      %s285 = ssub.s32 %s268, %s283
      %s286 = ssub.s32 %s269, %s284
      %s287 = sor.u32 %s285, %s286
      %p288 = scmp.eq.s32.totalorder %s287, 0
      %s290 = sadd.s32 %s289, 1
      %s291 = scalar_select %p288, %s289, %s290
      %p294 = pneg %p288
      %p295 = scmp.eq.s32.totalorder %s30, 7
      %p296 = por %p294, %p295
      %p297 = scmp.ne.s32.totalorder %s289, %s292
      %p298 = scmp.eq.s32.totalorder %s30, 0
      %p299 = por %p297, %p298
      %p300 = scmp.ne.s32.totalorder %s289, %s292
      %p301 = scmp.eq.s32.totalorder %s35, 7
      %p302 = por %p300, %p301
      %p303 = scmp.ne.s32.totalorder %s292, %s293
      %p304 = scmp.eq.s32.totalorder %s35, 0
      %p305 = por %p303, %p304
      %p306 = scmp.ne.s32.totalorder %s292, %s293
      %p307 = scmp.eq.s32.totalorder %s36, 7
      %p308 = por %p306, %p307
      %p310 = scmp.ne.s32.totalorder %s293, %s309
      %p311 = scmp.eq.s32.totalorder %s36, 0
      %p312 = por %p310, %p311
      %s313 = sld [smem:[#allocation5 + %s37]]
      %p314 = scmp.lt.s32.totalorder %s38, %s313
      %s315 = ssub.s32 %s313, 1
      %p316 = scmp.gt.s32.totalorder %s315, 0
      %s317 = scalar_select %p316, %s315, 0
      %s318 = scalar_select %p314, %s38, %s317
      %s319 = sshra.s32 %s318, 7
      %s320 = sand.u32 %s318, 127
      %s321 = sadd.s32 %s319, %s37
      %s322 = smul.u32 %s321, 128
      %s323 = sshra.s32 %s318, 7
      %s324 = sand.u32 %s318, 127
      %s325 = sadd.s32 %s322, %s324
      %s326 = sld [smem:[#allocation4 + %s325]]
      %s327 = sld [smem:[#allocation5 + %s56]]
      %p328 = scmp.lt.s32.totalorder %s52, %s327
      %s329 = ssub.s32 %s327, 1
      %p330 = scmp.gt.s32.totalorder %s329, 0
      %s331 = scalar_select %p330, %s329, 0
      %s332 = scalar_select %p328, %s52, %s331
      %s333 = sshra.s32 %s332, 7
      %s334 = sand.u32 %s332, 127
      %s335 = sadd.s32 %s333, %s56
      %s336 = smul.u32 %s335, 128
      %s337 = sshra.s32 %s332, 7
      %s338 = sand.u32 %s332, 127
      %s339 = sadd.s32 %s336, %s338
      %s340 = sld [smem:[#allocation4 + %s339]]
      %s341 = ssub.s32 %s326, %s340
      %p342 = scmp.eq.s32.totalorder %s341, 0
      %s344 = sadd.s32 %s343, 1
      %s345 = scalar_select %p342, %s343, %s344
      %p348 = pneg %p342
      %p349 = scmp.eq.s32.totalorder %s30, 7
      %p350 = por %p348, %p349
      %p351 = scmp.ne.s32.totalorder %s343, %s346
      %p352 = scmp.eq.s32.totalorder %s30, 0
      %p353 = por %p351, %p352
      %p354 = scmp.ne.s32.totalorder %s343, %s346
      %p355 = scmp.eq.s32.totalorder %s35, 7
      %p356 = por %p354, %p355
      %p357 = scmp.ne.s32.totalorder %s346, %s347
      %p358 = scmp.eq.s32.totalorder %s35, 0
      %p359 = por %p357, %p358
      %p360 = scmp.ne.s32.totalorder %s346, %s347
      %p361 = scmp.eq.s32.totalorder %s36, 7
      %p362 = por %p360, %p361
      %p364 = scmp.ne.s32.totalorder %s347, %s363
      %p365 = scmp.eq.s32.totalorder %s36, 0
      %p366 = por %p364, %p365
      %s367 = ssub.s32 %s37, %s56
      %p368 = scmp.eq.s32.totalorder %s367, 0
      %s370 = sadd.s32 %s369, 1
      %s371 = scalar_select %p368, %s369, %s370
      %p374 = pneg %p368
      %p375 = scmp.eq.s32.totalorder %s30, 7
      %p376 = por %p374, %p375
      %p377 = scmp.ne.s32.totalorder %s369, %s372
      %p378 = scmp.eq.s32.totalorder %s30, 0
      %p379 = por %p377, %p378
      %p380 = scmp.ne.s32.totalorder %s369, %s372
      %p381 = scmp.eq.s32.totalorder %s35, 7
      %p382 = por %p380, %p381
      %p383 = scmp.ne.s32.totalorder %s372, %s373
      %p384 = scmp.eq.s32.totalorder %s35, 0
      %p385 = por %p383, %p384
      %p386 = scmp.ne.s32.totalorder %s372, %s373
      %p387 = scmp.eq.s32.totalorder %s36, 7
      %p388 = por %p386, %p387
      %p390 = scmp.ne.s32.totalorder %s373, %s389
      %p391 = scmp.eq.s32.totalorder %s36, 0
      %p392 = por %p390, %p391
      %p393 = scmp.le.s32.totalorder 1, %s30
      %p394 = scmp.lt.s32.totalorder %s30, 9
      %p395 = pnand %p393, %p394
      %p396 = pneg %p395
      // Predicated region
      $region9: #{tpu_custom_call.1} parent=5 // pred_check
        _
      $region10: #{tpu_custom_call.1} parent=5 // pred_check_branch
        %398 = sbr.rel (%p395) target = $region12
      $region11: #{tpu_custom_call.1} parent=5 // pred_region
        %s399 = ssub.s32 %s30, 1
        // Predicated region
        $region13: #{tpu_custom_call.1} parent=11 // pred_check
          %p400 = pneg %p131
        $region14: #{tpu_custom_call.1} parent=11 // pred_check_branch
          %402 = sbr.rel (%p400) target = $region16
        $region15: #{tpu_custom_call.1} parent=11 // pred_region
          %s403 = smul.u32 2, %s40
          %p404 = scmp.lt.s32.totalorder %s403, 1
          %s405 = scalar_select %p404, %s403, 1
          %s406 = smul.addr %s405, 4
          %s407 = scalar_lea.vmem %s3, %s406
          %s408 = smul.u32 2, %s40
        $region16: #{tpu_custom_call.1} parent=11 // pred_fallthru
          _
      $region12: #{tpu_custom_call.1} parent=5 // pred_fallthru
        _
      %p409 = scmp.lt.s32.totalorder %s30, 8
      // Predicated region
      $region17: #{tpu_custom_call.1} parent=5 // pred_check
        %p410 = pneg %p409
      $region18: #{tpu_custom_call.1} parent=5 // pred_check_branch
        %412 = sbr.rel (%p410) target = $region20
      $region19: #{tpu_custom_call.1} parent=5 // pred_region
        // Predicated region
        $region21: #{tpu_custom_call.1} parent=19 // pred_check
          %p413 = pneg %p99
        $region22: #{tpu_custom_call.1} parent=19 // pred_check_branch
          %415 = sbr.rel (%p413) target = $region24
        $region23: #{tpu_custom_call.1} parent=19 // pred_region
          %s416 = sld [smem:[#allocation5 + %s37]]
          %p417 = scmp.lt.s32.totalorder %s38, %s416
          %s418 = ssub.s32 %s416, 1
          %p419 = scmp.gt.s32.totalorder %s418, 0
          %s420 = scalar_select %p419, %s418, 0
          %s421 = scalar_select %p417, %s38, %s420
          %s422 = sshra.s32 %s421, 7
          %s423 = sand.u32 %s421, 127
          %s424 = sadd.s32 %s422, %s37
          %s425 = smul.u32 %s424, 128
          %s426 = sshra.s32 %s421, 7
          %s427 = sand.u32 %s421, 127
          %s428 = sadd.s32 %s425, %s427
          %s429 = sld [smem:[#allocation4 + %s428]]
          %s430 = smul.u32 2, %s37
          %p431 = scmp.lt.s32.totalorder %s429, 7
          %s432 = scalar_select %p431, %s429, 7
          %p433 = scmp.lt.s32.totalorder %s430, 1
          %s434 = scalar_select %p433, %s430, 1
          %s435 = smul.addr %s432, 2
          %s436 = sadd.s32 %s434, %s435
          %s437 = smul.addr %s436, 8
          %s438 = scalar_lea.vmem %s2, %s437
          %s439 = sld [smem:[#allocation5 + %s37]]
          %p440 = scmp.lt.s32.totalorder %s38, %s439
          %s441 = ssub.s32 %s439, 1
          %p442 = scmp.gt.s32.totalorder %s441, 0
          %s443 = scalar_select %p442, %s441, 0
          %s444 = scalar_select %p440, %s38, %s443
          %s445 = sshra.s32 %s444, 7
          %s446 = sand.u32 %s444, 127
          %s447 = sadd.s32 %s445, %s37
          %s448 = smul.u32 %s447, 128
          %s449 = sshra.s32 %s444, 7
          %s450 = sand.u32 %s444, 127
          %s451 = sadd.s32 %s448, %s450
          %s452 = sld [smem:[#allocation4 + %s451]]
          %s453 = smul.u32 2, %s37
        $region24: #{tpu_custom_call.1} parent=19 // pred_fallthru
          _
        // Predicated region
        $region25: #{tpu_custom_call.1} parent=19 // pred_check
          %p454 = pneg %p183
        $region26: #{tpu_custom_call.1} parent=19 // pred_check_branch
          %456 = sbr.rel (%p454) target = $region28
        $region27: #{tpu_custom_call.1} parent=19 // pred_region
          %s457 = sand.u32 %s173, 1
          %s458 = scalar_lea.sflag [#allocation7], %s457
          %s459 = sand.u32 %s173, 1
          %s460 = smul.addr %s459, 128
          %s461 = scalar_lea.vmem [#allocation6], %s460
          %s462 = sld [smem:[#allocation5 + %s37]]
          %p463 = scmp.lt.s32.totalorder %s38, %s462
          %s464 = ssub.s32 %s462, 1
          %p465 = scmp.gt.s32.totalorder %s464, 0
          %s466 = scalar_select %p465, %s464, 0
          %s467 = scalar_select %p463, %s38, %s466
          %s468 = sshra.s32 %s467, 7
          %s469 = sand.u32 %s467, 127
          %s470 = sadd.s32 %s468, %s37
          %s471 = smul.u32 %s470, 128
          %s472 = sshra.s32 %s467, 7
          %s473 = sand.u32 %s467, 127
          %s474 = sadd.s32 %s471, %s473
          %s475 = sld [smem:[#allocation4 + %s474]]
          %s476 = scalar_select %p463, %s39, 0
          %s477 = smul.u32 32, %s476
          %479 = vsyncadd %s458, 0
          %s480 = smul.addr %s475, 32
          %s481 = sadd.s32 %s477, %s480
          %s482 = smul.addr %s481, 4
          %s483 = scalar_lea.hbm %s4, %s482
          %s484 = sshll.u32 %s483, 4
          %s485 = int_to_ptr.hbm [resolvable:$true] %s484
          %s486 = sshll.u32 %s461, 4
          %s487 = int_to_ptr.vmem [resolvable:$true] %s486
          %492 = dma.hbm_to_vmem [thread:$0]  %s485, 2048, %s487, %s458, 64, 64, 4
        $region28: #{tpu_custom_call.1} parent=19 // pred_fallthru
          _
        // Predicated region
        $region29: #{tpu_custom_call.1} parent=19 // pred_check
          %p493 = pneg %p241
        $region30: #{tpu_custom_call.1} parent=19 // pred_check_branch
          %495 = sbr.rel (%p493) target = $region32
        $region31: #{tpu_custom_call.1} parent=19 // pred_region
          %s496 = sld [smem:[#allocation5 + %s37]]
          %p497 = scmp.lt.s32.totalorder %s38, %s496
          %s498 = ssub.s32 %s496, 1
          %p499 = scmp.gt.s32.totalorder %s498, 0
          %s500 = scalar_select %p499, %s498, 0
          %s501 = scalar_select %p497, %s38, %s500
          %s502 = sshra.s32 %s501, 7
          %s503 = sand.u32 %s501, 127
          %s504 = sadd.s32 %s502, %s37
          %s505 = smul.u32 %s504, 128
          %s506 = sshra.s32 %s501, 7
          %s507 = sand.u32 %s501, 127
          %s508 = sadd.s32 %s505, %s507
          %s509 = sld [smem:[#allocation4 + %s508]]
          %s510 = scalar_select %p497, %s39, 0
          %s511 = smul.u32 2, %s510
          %p512 = scmp.lt.s32.totalorder %s509, 7
          %s513 = scalar_select %p512, %s509, 7
          %p514 = scmp.lt.s32.totalorder %s511, 1
          %s515 = scalar_select %p514, %s511, 1
          %s516 = smul.addr %s513, 2
          %s517 = sadd.s32 %s515, %s516
          %s518 = scalar_lea.vmem %s5, %s517
          %s519 = sld [smem:[#allocation5 + %s37]]
          %p520 = scmp.lt.s32.totalorder %s38, %s519
          %s521 = ssub.s32 %s519, 1
          %p522 = scmp.gt.s32.totalorder %s521, 0
          %s523 = scalar_select %p522, %s521, 0
          %s524 = scalar_select %p520, %s38, %s523
          %s525 = sshra.s32 %s524, 7
          %s526 = sand.u32 %s524, 127
          %s527 = sadd.s32 %s525, %s37
          %s528 = smul.u32 %s527, 128
          %s529 = sshra.s32 %s524, 7
          %s530 = sand.u32 %s524, 127
          %s531 = sadd.s32 %s528, %s530
          %s532 = sld [smem:[#allocation4 + %s531]]
          %s533 = scalar_select %p520, %s39, 0
          %s534 = smul.u32 2, %s533
        $region32: #{tpu_custom_call.1} parent=19 // pred_fallthru
          _
        // Predicated region
        $region33: #{tpu_custom_call.1} parent=19 // pred_check
          %p535 = pneg %p299
        $region34: #{tpu_custom_call.1} parent=19 // pred_check_branch
          %537 = sbr.rel (%p535) target = $region36
        $region35: #{tpu_custom_call.1} parent=19 // pred_region
          %s538 = sand.u32 %s289, 1
          %s539 = scalar_lea.sflag [#allocation10], %s538
          %s540 = sand.u32 %s289, 1
          %s541 = smul.addr %s540, 128
          %s542 = scalar_lea.vmem [#allocation9], %s541
          %s543 = sld [smem:[#allocation5 + %s37]]
          %p544 = scmp.lt.s32.totalorder %s38, %s543
          %s545 = ssub.s32 %s543, 1
          %p546 = scmp.gt.s32.totalorder %s545, 0
          %s547 = scalar_select %p546, %s545, 0
          %s548 = scalar_select %p544, %s38, %s547
          %s549 = sshra.s32 %s548, 7
          %s550 = sand.u32 %s548, 127
          %s551 = sadd.s32 %s549, %s37
          %s552 = smul.u32 %s551, 128
          %s553 = sshra.s32 %s548, 7
          %s554 = sand.u32 %s548, 127
          %s555 = sadd.s32 %s552, %s554
          %s556 = sld [smem:[#allocation4 + %s555]]
          %s557 = scalar_select %p544, %s39, 0
          %s558 = smul.u32 2, %s557
          %560 = vsyncadd %s539, 0
          %s561 = smul.addr %s556, 32
          %s562 = sadd.s32 %s558, %s561
          %s563 = smul.addr %s562, 4
          %s564 = scalar_lea.hbm %s6, %s563
          %s565 = sshll.u32 %s564, 4
          %s566 = int_to_ptr.hbm [resolvable:$true] %s565
          %s567 = sshll.u32 %s542, 4
          %s568 = int_to_ptr.vmem [resolvable:$true] %s567
          %573 = dma.hbm_to_vmem [thread:$0]  %s566, 2048, %s568, %s539, 128, 128, 8
        $region36: #{tpu_custom_call.1} parent=19 // pred_fallthru
          _
        // Predicated region
        $region37: #{tpu_custom_call.1} parent=19 // pred_check
          %p574 = pneg %p353
        $region38: #{tpu_custom_call.1} parent=19 // pred_check_branch
          %576 = sbr.rel (%p574) target = $region40
        $region39: #{tpu_custom_call.1} parent=19 // pred_region
          %s577 = sld [smem:[#allocation5 + %s37]]
          %p578 = scmp.lt.s32.totalorder %s38, %s577
          %s579 = ssub.s32 %s577, 1
          %p580 = scmp.gt.s32.totalorder %s579, 0
          %s581 = scalar_select %p580, %s579, 0
          %s582 = scalar_select %p578, %s38, %s581
          %s583 = sshra.s32 %s582, 7
          %s584 = sand.u32 %s582, 127
          %s585 = sadd.s32 %s583, %s37
          %s586 = smul.u32 %s585, 128
          %s587 = sshra.s32 %s582, 7
          %s588 = sand.u32 %s582, 127
          %s589 = sadd.s32 %s586, %s588
          %s590 = sld [smem:[#allocation4 + %s589]]
          %p591 = scmp.lt.s32.totalorder %s590, 7
          %s592 = scalar_select %p591, %s590, 7
          %s593 = scalar_lea.vmem %s7, %s592
          %s594 = sld [smem:[#allocation5 + %s37]]
          %p595 = scmp.lt.s32.totalorder %s38, %s594
          %s596 = ssub.s32 %s594, 1
          %p597 = scmp.gt.s32.totalorder %s596, 0
          %s598 = scalar_select %p597, %s596, 0
          %s599 = scalar_select %p595, %s38, %s598
          %s600 = sshra.s32 %s599, 7
          %s601 = sand.u32 %s599, 127
          %s602 = sadd.s32 %s600, %s37
          %s603 = smul.u32 %s602, 128
          %s604 = sshra.s32 %s599, 7
          %s605 = sand.u32 %s599, 127
          %s606 = sadd.s32 %s603, %s605
          %s607 = sld [smem:[#allocation4 + %s606]]
        $region40: #{tpu_custom_call.1} parent=19 // pred_fallthru
          _
      $region20: #{tpu_custom_call.1} parent=5 // pred_fallthru
        _
      %p608 = scmp.le.s32.totalorder 1, %s30
      %p609 = scmp.lt.s32.totalorder %s30, 9
      %p610 = pnand %p608, %p609
      %p611 = pneg %p610
      // Predicated region
      $region41: #{tpu_custom_call.1} parent=5 // pred_check
        _
      $region42: #{tpu_custom_call.1} parent=5 // pred_check_branch
        %613 = sbr.rel (%p610) target = $region44
      $region43: #{tpu_custom_call.1} parent=5 // pred_region
        %s614 = ssub.s32 %s30, 1
        %s615 = sand.u32 %s176, 1
        %s616 = scalar_lea.sflag [#allocation7], %s615
        %s617 = sand.u32 %s176, 1
        %s618 = smul.addr %s617, 128
        %s619 = scalar_lea.vmem [#allocation6], %s618
        // Predicated region
        $region45: #{tpu_custom_call.1} parent=43 // pred_check
          %p620 = pneg %p189
        $region46: #{tpu_custom_call.1} parent=43 // pred_check_branch
          %622 = sbr.rel (%p620) target = $region48
        $region47: #{tpu_custom_call.1} parent=43 // pred_region
          %624 = dma.done %s616, 2048
        $region48: #{tpu_custom_call.1} parent=43 // pred_fallthru
          _
        %s625 = sand.u32 %s292, 1
        %s626 = scalar_lea.sflag [#allocation10], %s625
        %s627 = sand.u32 %s292, 1
        %s628 = smul.addr %s627, 128
        %s629 = scalar_lea.vmem [#allocation9], %s628
        // Predicated region
        $region49: #{tpu_custom_call.1} parent=43 // pred_check
          %p630 = pneg %p305
        $region50: #{tpu_custom_call.1} parent=43 // pred_check_branch
          %632 = sbr.rel (%p630) target = $region52
        $region51: #{tpu_custom_call.1} parent=43 // pred_region
          %634 = dma.done %s626, 2048
        $region52: #{tpu_custom_call.1} parent=43 // pred_fallthru
          _
        %s635 = sld [smem:[#allocation5 + %s40]]
        %p636 = scmp.lt.s32.totalorder %s41, %s635
        %s637 = ssub.s32 %s635, 1
        %p638 = scmp.gt.s32.totalorder %s637, 0
        %s639 = scalar_select %p638, %s637, 0
        %s640 = scalar_select %p636, %s41, %s639
        %s641 = sshra.s32 %s640, 7
        %s642 = sand.u32 %s640, 127
        %s643 = sadd.s32 %s641, %s40
        %s644 = smul.u32 %s643, 128
        %s645 = sshra.s32 %s640, 7
        %s646 = sand.u32 %s640, 127
        %s647 = sadd.s32 %s644, %s646
        %s648 = sld [smem:[#allocation4 + %s647]]
        %s649 = smul.u32 2, %s40
        %p650 = scmp.lt.s32.totalorder %s648, 7
        %s651 = scalar_select %p650, %s648, 7
        %p652 = scmp.lt.s32.totalorder %s649, 1
        %s653 = scalar_select %p652, %s649, 1
        %s654 = smul.addr %s651, 2
        %s655 = sadd.s32 %s653, %s654
        %s656 = smul.addr %s655, 8
        %s657 = scalar_lea.vmem %s2, %s656
        %p658 = pneg %p105
        %p659 = pneg %p102
        %s660 = smul.u32 2, %s40
        %p661 = scmp.lt.s32.totalorder %s660, 1
        %s662 = scalar_select %p661, %s660, 1
        %s663 = smul.addr %s662, 4
        %s664 = scalar_lea.vmem %s3, %s663
        %p665 = pneg %p131
        %p666 = pneg %p128
        %s667 = sand.u32 %s176, 1
        %s668 = scalar_lea.sflag [#allocation7], %s667
        %s669 = sand.u32 %s176, 1
        %s670 = smul.addr %s669, 128
        %s671 = scalar_lea.vmem [#allocation6], %s670
        %p672 = pneg %p189
        %p673 = pneg %p186
        %s674 = sld [smem:[#allocation5 + %s40]]
        %p675 = scmp.lt.s32.totalorder %s41, %s674
        %s676 = ssub.s32 %s674, 1
        %p677 = scmp.gt.s32.totalorder %s676, 0
        %s678 = scalar_select %p677, %s676, 0
        %s679 = scalar_select %p675, %s41, %s678
        %s680 = sshra.s32 %s679, 7
        %s681 = sand.u32 %s679, 127
        %s682 = sadd.s32 %s680, %s40
        %s683 = smul.u32 %s682, 128
        %s684 = sshra.s32 %s679, 7
        %s685 = sand.u32 %s679, 127
        %s686 = sadd.s32 %s683, %s685
        %s687 = sld [smem:[#allocation4 + %s686]]
        %s688 = scalar_select %p675, %s42, 0
        %s689 = smul.u32 2, %s688
        %p690 = scmp.lt.s32.totalorder %s687, 7
        %s691 = scalar_select %p690, %s687, 7
        %p692 = scmp.lt.s32.totalorder %s689, 1
        %s693 = scalar_select %p692, %s689, 1
        %s694 = smul.addr %s691, 2
        %s695 = sadd.s32 %s693, %s694
        %s696 = scalar_lea.vmem %s5, %s695
        %p697 = pneg %p247
        %p698 = pneg %p244
        %s699 = sand.u32 %s292, 1
        %s700 = scalar_lea.sflag [#allocation10], %s699
        %s701 = sand.u32 %s292, 1
        %s702 = smul.addr %s701, 128
        %s703 = scalar_lea.vmem [#allocation9], %s702
        %p704 = pneg %p305
        %p705 = pneg %p302
        %s706 = sld [smem:[#allocation5 + %s40]]
        %p707 = scmp.lt.s32.totalorder %s41, %s706
        %s708 = ssub.s32 %s706, 1
        %p709 = scmp.gt.s32.totalorder %s708, 0
        %s710 = scalar_select %p709, %s708, 0
        %s711 = scalar_select %p707, %s41, %s710
        %s712 = sshra.s32 %s711, 7
        %s713 = sand.u32 %s711, 127
        %s714 = sadd.s32 %s712, %s40
        %s715 = smul.u32 %s714, 128
        %s716 = sshra.s32 %s711, 7
        %s717 = sand.u32 %s711, 127
        %s718 = sadd.s32 %s715, %s717
        %s719 = sld [smem:[#allocation4 + %s718]]
        %p720 = scmp.lt.s32.totalorder %s719, 7
        %s721 = scalar_select %p720, %s719, 7
        %s722 = scalar_lea.vmem %s7, %s721
        %p723 = pneg %p359
        %p724 = pneg %p356
        %p725 = pneg %p385
        %p726 = pneg %p382
        %s727 = sld [smem:[#allocation5 + %s40]]
        %p728 = scmp.lt.s32.totalorder %s41, %s727
        %s729 = ssub.s32 %s727, 1
        %p730 = scmp.gt.s32.totalorder %s729, 0
        %s731 = scalar_select %p730, %s729, 0
        %s732 = scalar_select %p728, %s41, %s731
        %s733 = sshra.s32 %s732, 7
        %s734 = sand.u32 %s732, 127
        %s735 = sadd.s32 %s733, %s40
        %s736 = smul.u32 %s735, 128
        %s737 = sshra.s32 %s732, 7
        %s738 = sand.u32 %s732, 127
        %s739 = sadd.s32 %s736, %s738
        %s740 = sld [smem:[#allocation4 + %s739]]
        %s741 = smul.u32 2, %s40
        %p742 = scmp.lt.s32.totalorder %s740, 7
        %s743 = scalar_select %p742, %s740, 7
        %p744 = scmp.lt.s32.totalorder %s741, 1
        %s745 = scalar_select %p744, %s741, 1
        %s746 = smul.addr %s743, 2
        %s747 = sadd.s32 %s745, %s746
        %s748 = smul.addr %s747, 8
        %s749 = scalar_lea.vmem %s2, %s748
        %s750 = sld [smem:[#allocation5 + %s40]]
        %p751 = scmp.lt.s32.totalorder %s41, %s750
        %s752 = ssub.s32 %s750, 1
        %p753 = scmp.gt.s32.totalorder %s752, 0
        %s754 = scalar_select %p753, %s752, 0
        %s755 = scalar_select %p751, %s41, %s754
        %s756 = sshra.s32 %s755, 7
        %s757 = sand.u32 %s755, 127
        %s758 = sadd.s32 %s756, %s40
        %s759 = smul.u32 %s758, 128
        %s760 = sshra.s32 %s755, 7
        %s761 = sand.u32 %s755, 127
        %s762 = sadd.s32 %s759, %s761
        %s763 = sld [smem:[#allocation4 + %s762]]
        %s764 = smul.u32 2, %s40
        %s765 = smul.u32 2, %s40
        %p766 = scmp.lt.s32.totalorder %s765, 1
        %s767 = scalar_select %p766, %s765, 1
        %s768 = smul.addr %s767, 4
        %s769 = scalar_lea.vmem %s3, %s768
        %s770 = smul.u32 2, %s40
        %s771 = sld [smem:[#allocation5 + %s40]]
        %p772 = scmp.lt.s32.totalorder %s41, %s771
        %s773 = ssub.s32 %s771, 1
        %p774 = scmp.gt.s32.totalorder %s773, 0
        %s775 = scalar_select %p774, %s773, 0
        %s776 = scalar_select %p772, %s41, %s775
        %s777 = sshra.s32 %s776, 7
        %s778 = sand.u32 %s776, 127
        %s779 = sadd.s32 %s777, %s40
        %s780 = smul.u32 %s779, 128
        %s781 = sshra.s32 %s776, 7
        %s782 = sand.u32 %s776, 127
        %s783 = sadd.s32 %s780, %s782
        %s784 = sld [smem:[#allocation4 + %s783]]
        %s785 = scalar_select %p772, %s42, 0
        %s786 = smul.u32 32, %s785
        %s787 = sld [smem:[#allocation5 + %s40]]
        %p788 = scmp.lt.s32.totalorder %s41, %s787
        %s789 = ssub.s32 %s787, 1
        %p790 = scmp.gt.s32.totalorder %s789, 0
        %s791 = scalar_select %p790, %s789, 0
        %s792 = scalar_select %p788, %s41, %s791
        %s793 = sshra.s32 %s792, 7
        %s794 = sand.u32 %s792, 127
        %s795 = sadd.s32 %s793, %s40
        %s796 = smul.u32 %s795, 128
        %s797 = sshra.s32 %s792, 7
        %s798 = sand.u32 %s792, 127
        %s799 = sadd.s32 %s796, %s798
        %s800 = sld [smem:[#allocation4 + %s799]]
        %s801 = scalar_select %p788, %s42, 0
        %s802 = smul.u32 2, %s801
        %p803 = scmp.lt.s32.totalorder %s800, 7
        %s804 = scalar_select %p803, %s800, 7
        %p805 = scmp.lt.s32.totalorder %s802, 1
        %s806 = scalar_select %p805, %s802, 1
        %s807 = smul.addr %s804, 2
        %s808 = sadd.s32 %s806, %s807
        %s809 = scalar_lea.vmem %s5, %s808
        %s810 = sld [smem:[#allocation5 + %s40]]
        %p811 = scmp.lt.s32.totalorder %s41, %s810
        %s812 = ssub.s32 %s810, 1
        %p813 = scmp.gt.s32.totalorder %s812, 0
        %s814 = scalar_select %p813, %s812, 0
        %s815 = scalar_select %p811, %s41, %s814
        %s816 = sshra.s32 %s815, 7
        %s817 = sand.u32 %s815, 127
        %s818 = sadd.s32 %s816, %s40
        %s819 = smul.u32 %s818, 128
        %s820 = sshra.s32 %s815, 7
        %s821 = sand.u32 %s815, 127
        %s822 = sadd.s32 %s819, %s821
        %s823 = sld [smem:[#allocation4 + %s822]]
        %s824 = scalar_select %p811, %s42, 0
        %s825 = smul.u32 2, %s824
        %s826 = sld [smem:[#allocation5 + %s40]]
        %p827 = scmp.lt.s32.totalorder %s41, %s826
        %s828 = ssub.s32 %s826, 1
        %p829 = scmp.gt.s32.totalorder %s828, 0
        %s830 = scalar_select %p829, %s828, 0
        %s831 = scalar_select %p827, %s41, %s830
        %s832 = sshra.s32 %s831, 7
        %s833 = sand.u32 %s831, 127
        %s834 = sadd.s32 %s832, %s40
        %s835 = smul.u32 %s834, 128
        %s836 = sshra.s32 %s831, 7
        %s837 = sand.u32 %s831, 127
        %s838 = sadd.s32 %s835, %s837
        %s839 = sld [smem:[#allocation4 + %s838]]
        %s840 = scalar_select %p827, %s42, 0
        %s841 = smul.u32 2, %s840
        %s842 = sld [smem:[#allocation5 + %s40]]
        %p843 = scmp.lt.s32.totalorder %s41, %s842
        %s844 = ssub.s32 %s842, 1
        %p845 = scmp.gt.s32.totalorder %s844, 0
        %s846 = scalar_select %p845, %s844, 0
        %s847 = scalar_select %p843, %s41, %s846
        %s848 = sshra.s32 %s847, 7
        %s849 = sand.u32 %s847, 127
        %s850 = sadd.s32 %s848, %s40
        %s851 = smul.u32 %s850, 128
        %s852 = sshra.s32 %s847, 7
        %s853 = sand.u32 %s847, 127
        %s854 = sadd.s32 %s851, %s853
        %s855 = sld [smem:[#allocation4 + %s854]]
        %p856 = scmp.lt.s32.totalorder %s855, 7
        %s857 = scalar_select %p856, %s855, 7
        %s858 = scalar_lea.vmem %s7, %s857
        %s859 = sld [smem:[#allocation5 + %s40]]
        %p860 = scmp.lt.s32.totalorder %s41, %s859
        %s861 = ssub.s32 %s859, 1
        %p862 = scmp.gt.s32.totalorder %s861, 0
        %s863 = scalar_select %p862, %s861, 0
        %s864 = scalar_select %p860, %s41, %s863
        %s865 = sshra.s32 %s864, 7
        %s866 = sand.u32 %s864, 127
        %s867 = sadd.s32 %s865, %s40
        %s868 = smul.u32 %s867, 128
        %s869 = sshra.s32 %s864, 7
        %s870 = sand.u32 %s864, 127
        %s871 = sadd.s32 %s868, %s870
        %s872 = sld [smem:[#allocation4 + %s871]]
        %s873 = smul.u32 2, %s40
        %s874 = sld [smem:[#allocation5 + %s40]]
        %p875 = scmp.lt.s32.totalorder %s41, %s874
        %p876 = scmp.eq.s32.totalorder %s41, 0
        %p877 = scmp.eq.s32.totalorder %s42, 0
        %p878 = pnand %p876, %p877
        %p879 = pneg %p878
        // Predicated region
        $region53: #{tpu_custom_call.1} parent=43 // pred_check
          _
        $region54: #{tpu_custom_call.1} parent=43 // pred_check_branch
          %881 = sbr.rel (%p878) target = $region56
        $region55: #{tpu_custom_call.1} parent=43 // pred_region
          %882 = vst [vmem:[#allocation2] sm:$0xff] 0.0
          %883 = vst [vmem:[#allocation2 + $0x8] sm:$0xff] 0.0
        $region56: #{tpu_custom_call.1} parent=43 // pred_fallthru
          _
        // Predicated region
        $region57: #{tpu_custom_call.1} parent=43 // pred_check
          %p884 = pneg %p875
        $region58: #{tpu_custom_call.1} parent=43 // pred_check_branch
          %886 = sbr.rel (%p884) target = $region60
        $region59: #{tpu_custom_call.1} parent=43 // pred_region
          %v887 = vld [vmem:[%s769] sm:$0xf]
          %v888 = vld [vmem:[%s769 + $0x4] sm:$0xf]
          %v889 = vld [vmem:[%s619] sm:$0xf]
          %v890 = vld [vmem:[%s619 + $0x4] sm:$0xf]
          %v891 = vld [vmem:[%s619 + $0x8] sm:$0xf]
          %v892 = vld [vmem:[%s619 + $0xc] sm:$0xf]
          %v893 = vld [vmem:[%s619 + $0x10] sm:$0xf]
          %v894 = vld [vmem:[%s619 + $0x14] sm:$0xf]
          %v895 = vld [vmem:[%s619 + $0x18] sm:$0xf]
          %v896 = vld [vmem:[%s619 + $0x1c] sm:$0xf]
          %v897 = vld [vmem:[%s619 + $0x20] sm:$0xf]
          %v898 = vld [vmem:[%s619 + $0x24] sm:$0xf]
          %v899 = vld [vmem:[%s619 + $0x28] sm:$0xf]
          %v900 = vld [vmem:[%s619 + $0x2c] sm:$0xf]
          %v901 = vld [vmem:[%s619 + $0x30] sm:$0xf]
          %v902 = vld [vmem:[%s619 + $0x34] sm:$0xf]
          %v903 = vld [vmem:[%s619 + $0x38] sm:$0xf]
          %v904 = vld [vmem:[%s619 + $0x3c] sm:$0xf]
          %v905 = vld [vmem:[%s619 + $0x40] sm:$0xf]
          %v906 = vld [vmem:[%s619 + $0x44] sm:$0xf]
          %v907 = vld [vmem:[%s619 + $0x48] sm:$0xf]
          %v908 = vld [vmem:[%s619 + $0x4c] sm:$0xf]
          %v909 = vld [vmem:[%s619 + $0x50] sm:$0xf]
          %v910 = vld [vmem:[%s619 + $0x54] sm:$0xf]
          %v911 = vld [vmem:[%s619 + $0x58] sm:$0xf]
          %v912 = vld [vmem:[%s619 + $0x5c] sm:$0xf]
          %v913 = vld [vmem:[%s619 + $0x60] sm:$0xf]
          %v914 = vld [vmem:[%s619 + $0x64] sm:$0xf]
          %v915 = vld [vmem:[%s619 + $0x68] sm:$0xf]
          %v916 = vld [vmem:[%s619 + $0x6c] sm:$0xf]
          %v917 = vld [vmem:[%s619 + $0x70] sm:$0xf]
          %v918 = vld [vmem:[%s619 + $0x74] sm:$0xf]
          %v919 = vld [vmem:[%s619 + $0x78] sm:$0xf]
          %v920 = vld [vmem:[%s619 + $0x7c] sm:$0xf]
          %v921 = vld [vmem:[%s809] sm:$0x3]
          %v923 = vperm.slane %v921, 0
          %v924 = vperm.slane %v921, 1
          %v929 = vunpack.c.l.b16 %v887
          %v930 = vunpack.c.l.b16 %v888
          %v931 = vpack.c.b16 %v930, %v929
          %v965 = vunpack.c.l.b16 %v889
          %v966 = vunpack.c.l.b16 %v890
          %v967 = vunpack.c.l.b16 %v891
          %v968 = vunpack.c.l.b16 %v892
          %v969 = vunpack.c.l.b16 %v893
          %v970 = vunpack.c.l.b16 %v894
          %v971 = vunpack.c.l.b16 %v895
          %v972 = vunpack.c.l.b16 %v896
          %v973 = vunpack.c.l.b16 %v897
          %v974 = vunpack.c.l.b16 %v898
          %v975 = vunpack.c.l.b16 %v899
          %v976 = vunpack.c.l.b16 %v900
          %v977 = vunpack.c.l.b16 %v901
          %v978 = vunpack.c.l.b16 %v902
          %v979 = vunpack.c.l.b16 %v903
          %v980 = vunpack.c.l.b16 %v904
          %v981 = vunpack.c.l.b16 %v905
          %v982 = vunpack.c.l.b16 %v906
          %v983 = vunpack.c.l.b16 %v907
          %v984 = vunpack.c.l.b16 %v908
          %v985 = vunpack.c.l.b16 %v909
          %v986 = vunpack.c.l.b16 %v910
          %v987 = vunpack.c.l.b16 %v911
          %v988 = vunpack.c.l.b16 %v912
          %v989 = vunpack.c.l.b16 %v913
          %v990 = vunpack.c.l.b16 %v914
          %v991 = vunpack.c.l.b16 %v915
          %v992 = vunpack.c.l.b16 %v916
          %v993 = vunpack.c.l.b16 %v917
          %v994 = vunpack.c.l.b16 %v918
          %v995 = vunpack.c.l.b16 %v919
          %v996 = vunpack.c.l.b16 %v920
          %v997 = vpack.c.b16 %v966, %v965
          %v998 = vpack.c.b16 %v968, %v967
          %v999 = vpack.c.b16 %v970, %v969
          %v1000 = vpack.c.b16 %v972, %v971
          %v1001 = vpack.c.b16 %v974, %v973
          %v1002 = vpack.c.b16 %v976, %v975
          %v1003 = vpack.c.b16 %v978, %v977
          %v1004 = vpack.c.b16 %v980, %v979
          %v1005 = vpack.c.b16 %v982, %v981
          %v1006 = vpack.c.b16 %v984, %v983
          %v1007 = vpack.c.b16 %v986, %v985
          %v1008 = vpack.c.b16 %v988, %v987
          %v1009 = vpack.c.b16 %v990, %v989
          %v1010 = vpack.c.b16 %v992, %v991
          %v1011 = vpack.c.b16 %v994, %v993
          %v1012 = vpack.c.b16 %v996, %v995
          %1029 = vmatpush.bf16.xpose.msra.mxu0 %v1004
          %1030 = vmatpush.bf16.xpose.msra.mxu0 %v1003
          %1031 = vmatpush.bf16.xpose.msra.mxu0 %v1002
          %1032 = vmatpush.bf16.xpose.msra.mxu0 %v1001
          %1033 = vmatpush.bf16.xpose.msra.mxu0 %v1000
          %1034 = vmatpush.bf16.xpose.msra.mxu0 %v999
          %1035 = vmatpush.bf16.xpose.msra.mxu0 %v998
          %1036 = vmatpush.bf16.xpose.msra.mxu0 %v997
          %1037 = vmatmul.bf16.gmra.mxu0 %v931
          %v1038 = vpop.f32.mrf.mxu0
          %v1039 = vadd.f32 %v923, %v1038
          %v1040 = vpop.f32.mrf.mxu0
          %v1041 = vadd.f32 %v923, %v1040
          %1042 = vdwg.mxu0
          %1043 = vmatpush.bf16.xpose.msra.mxu0 %v1012
          %1044 = vmatpush.bf16.xpose.msra.mxu0 %v1011
          %1045 = vmatpush.bf16.xpose.msra.mxu0 %v1010
          %1046 = vmatpush.bf16.xpose.msra.mxu0 %v1009
          %1047 = vmatpush.bf16.xpose.msra.mxu0 %v1008
          %1048 = vmatpush.bf16.xpose.msra.mxu0 %v1007
          %1049 = vmatpush.bf16.xpose.msra.mxu0 %v1006
          %1050 = vmatpush.bf16.xpose.msra.mxu0 %v1005
          %1051 = vmatmul.bf16.gmra.mxu0 %v931
          %v1052 = vpop.f32.mrf.mxu0
          %v1053 = vadd.f32 %v924, %v1052
          %v1054 = vpop.f32.mrf.mxu0
          %v1055 = vadd.f32 %v924, %v1054
          %1056 = vdwg.mxu0
          %v1057 = vmul.f32 %v1039, %v1039
          %v1058 = vmul.f32 %v1053, %v1053
          %v1059 = vmul.f32 %v1041, %v1041
          %v1060 = vmul.f32 %v1055, %v1055
          %v1061 = vmul.f32 %v1039, %v1057
          %v1062 = vmul.f32 %v1053, %v1058
          %v1063 = vmul.f32 %v1041, %v1059
          %v1064 = vmul.f32 %v1055, %v1060
          %v1065 = vmul.f32 %v1061, 0.044715
          %v1066 = vmul.f32 %v1062, 0.044715
          %v1067 = vmul.f32 %v1063, 0.044715
          %v1068 = vmul.f32 %v1064, 0.044715
          %v1069 = vadd.f32 %v1039, %v1065
          %v1070 = vadd.f32 %v1053, %v1066
          %v1071 = vadd.f32 %v1041, %v1067
          %v1072 = vadd.f32 %v1055, %v1068
          %v1073 = vmul.f32 %v1069, 0.7978846
          %v1074 = vmul.f32 %v1070, 0.7978846
          %v1075 = vmul.f32 %v1071, 0.7978846
          %v1076 = vmul.f32 %v1072, 0.7978846
          %v1077 = vtanh.pop %v1073
          %v1078 = vtanh.pop %v1074
          %v1079 = vtanh.pop %v1075
          %v1080 = vtanh.pop %v1076
          %v1081 = vadd.f32 %v1077, 1.0
          %v1082 = vadd.f32 %v1078, 1.0
          %v1083 = vadd.f32 %v1079, 1.0
          %v1084 = vadd.f32 %v1080, 1.0
          %v1085 = vmul.f32 %v1081, 0.5
          %v1086 = vmul.f32 %v1082, 0.5
          %v1087 = vmul.f32 %v1083, 0.5
          %v1088 = vmul.f32 %v1084, 0.5
          %v1089 = vmul.f32 %v1039, %v1085
          %v1090 = vmul.f32 %v1053, %v1086
          %v1091 = vmul.f32 %v1041, %v1087
          %v1092 = vmul.f32 %v1055, %v1088
          %v1093 = vpack.c.bf16 %v1091, %v1089
          %v1094 = vpack.c.bf16 %v1092, %v1090
          %v1095 = vld [vmem:[%s629] sm:$0xff]
          %v1096 = vld [vmem:[%s629 + $0x8] sm:$0xff]
          %v1097 = vld [vmem:[%s629 + $0x10] sm:$0xff]
          %v1098 = vld [vmem:[%s629 + $0x18] sm:$0xff]
          %v1099 = vld [vmem:[%s629 + $0x20] sm:$0xff]
          %v1100 = vld [vmem:[%s629 + $0x28] sm:$0xff]
          %v1101 = vld [vmem:[%s629 + $0x30] sm:$0xff]
          %v1102 = vld [vmem:[%s629 + $0x38] sm:$0xff]
          %v1103 = vld [vmem:[%s629 + $0x40] sm:$0xff]
          %v1104 = vld [vmem:[%s629 + $0x48] sm:$0xff]
          %v1105 = vld [vmem:[%s629 + $0x50] sm:$0xff]
          %v1106 = vld [vmem:[%s629 + $0x58] sm:$0xff]
          %v1107 = vld [vmem:[%s629 + $0x60] sm:$0xff]
          %v1108 = vld [vmem:[%s629 + $0x68] sm:$0xff]
          %v1109 = vld [vmem:[%s629 + $0x70] sm:$0xff]
          %v1110 = vld [vmem:[%s629 + $0x78] sm:$0xff]
          %v1127 = vunpack.c.l.b16 %v1095
          %v1128 = vunpack.c.h.b16 %v1095
          %v1129 = vunpack.c.l.b16 %v1096
          %v1130 = vunpack.c.h.b16 %v1096
          %v1131 = vunpack.c.l.b16 %v1097
          %v1132 = vunpack.c.h.b16 %v1097
          %v1133 = vunpack.c.l.b16 %v1098
          %v1134 = vunpack.c.h.b16 %v1098
          %v1135 = vunpack.c.l.b16 %v1099
          %v1136 = vunpack.c.h.b16 %v1099
          %v1137 = vunpack.c.l.b16 %v1100
          %v1138 = vunpack.c.h.b16 %v1100
          %v1139 = vunpack.c.l.b16 %v1101
          %v1140 = vunpack.c.h.b16 %v1101
          %v1141 = vunpack.c.l.b16 %v1102
          %v1142 = vunpack.c.h.b16 %v1102
          %v1143 = vunpack.c.l.b16 %v1103
          %v1144 = vunpack.c.h.b16 %v1103
          %v1145 = vunpack.c.l.b16 %v1104
          %v1146 = vunpack.c.h.b16 %v1104
          %v1147 = vunpack.c.l.b16 %v1105
          %v1148 = vunpack.c.h.b16 %v1105
          %v1149 = vunpack.c.l.b16 %v1106
          %v1150 = vunpack.c.h.b16 %v1106
          %v1151 = vunpack.c.l.b16 %v1107
          %v1152 = vunpack.c.h.b16 %v1107
          %v1153 = vunpack.c.l.b16 %v1108
          %v1154 = vunpack.c.h.b16 %v1108
          %v1155 = vunpack.c.l.b16 %v1109
          %v1156 = vunpack.c.h.b16 %v1109
          %v1157 = vunpack.c.l.b16 %v1110
          %v1158 = vunpack.c.h.b16 %v1110
          %v1159 = vpack.c.b16 %v1129, %v1127
          %v1160 = vpack.c.b16 %v1130, %v1128
          %v1161 = vpack.c.b16 %v1133, %v1131
          %v1162 = vpack.c.b16 %v1134, %v1132
          %v1163 = vpack.c.b16 %v1137, %v1135
          %v1164 = vpack.c.b16 %v1138, %v1136
          %v1165 = vpack.c.b16 %v1141, %v1139
          %v1166 = vpack.c.b16 %v1142, %v1140
          %v1167 = vpack.c.b16 %v1145, %v1143
          %v1168 = vpack.c.b16 %v1146, %v1144
          %v1169 = vpack.c.b16 %v1149, %v1147
          %v1170 = vpack.c.b16 %v1150, %v1148
          %v1171 = vpack.c.b16 %v1153, %v1151
          %v1172 = vpack.c.b16 %v1154, %v1152
          %v1173 = vpack.c.b16 %v1157, %v1155
          %v1174 = vpack.c.b16 %v1158, %v1156
          %1191 = vmatpush.bf16.xpose.msra.mxu0 %v1173
          %1192 = vmatpush.bf16.xpose.msra.mxu0 %v1171
          %1193 = vmatpush.bf16.xpose.msra.mxu0 %v1169
          %1194 = vmatpush.bf16.xpose.msra.mxu0 %v1167
          %1195 = vmatpush.bf16.xpose.msra.mxu0 %v1165
          %1196 = vmatpush.bf16.xpose.msra.mxu0 %v1163
          %1197 = vmatpush.bf16.xpose.msra.mxu0 %v1161
          %1198 = vmatpush.bf16.xpose.msra.mxu0 %v1159
          %1199 = vmatmul.bf16.gmra.mxu0 %v1093
          %v1200 = vpop.f32.mrf.mxu0
          %v1201 = vadd.f32 0.0, %v1200
          %v1202 = vpop.f32.mrf.mxu0
          %v1203 = vadd.f32 0.0, %v1202
          %1204 = vdwg.mxu0
          %1205 = vmatpush.bf16.xpose.msra.mxu0 %v1174
          %1206 = vmatpush.bf16.xpose.msra.mxu0 %v1172
          %1207 = vmatpush.bf16.xpose.msra.mxu0 %v1170
          %1208 = vmatpush.bf16.xpose.msra.mxu0 %v1168
          %1209 = vmatpush.bf16.xpose.msra.mxu0 %v1166
          %1210 = vmatpush.bf16.xpose.msra.mxu0 %v1164
          %1211 = vmatpush.bf16.xpose.msra.mxu0 %v1162
          %1212 = vmatpush.bf16.xpose.msra.mxu0 %v1160
          %1213 = vmatmul.bf16.gmra.mxu0 %v1094
          %v1214 = vpop.f32.mrf.mxu0
          %v1215 = vadd.f32 %v1201, %v1214
          %v1216 = vpop.f32.mrf.mxu0
          %v1217 = vadd.f32 %v1203, %v1216
          %1218 = vdwg.mxu0
          %v1219 = vld [vmem:[#allocation2] sm:$0xff]
          %v1220 = vld [vmem:[#allocation2 + $0x8] sm:$0xff]
          %v1221 = vld [vmem:[%s749] sm:$0xff]
          %v1222 = vld [vmem:[%s749 + $0x8] sm:$0xff]
          %1224 = vset.pattern.permute.xlu0 0
          %1225 = vperm.xlu0 %1224, %v1221
          %v1226 = vpop.permute.xlu0 %1225
          %1229 = vset.pattern.permute.xlu0 0
          %1230 = vperm.xlu0 %1229, %v1222
          %v1231 = vpop.permute.xlu0 %1230
          %v1233 = vmul.f32 %v1226, %v1215
          %v1234 = vmul.f32 %v1231, %v1217
          %v1235 = vadd.f32 %v1219, %v1233
          %v1236 = vadd.f32 %v1220, %v1234
          %1237 = vst [vmem:[#allocation2] sm:$0xff] %v1235
          %1238 = vst [vmem:[#allocation2 + $0x8] sm:$0xff] %v1236
          // Predicated region
          $region61: #{tpu_custom_call.1} parent=59 // pred_check
            %p1239 = pneg %p877
          $region62: #{tpu_custom_call.1} parent=59 // pred_check_branch
            %1241 = sbr.rel (%p1239) target = $region64
          $region63: #{tpu_custom_call.1} parent=59 // pred_region
            %v1242 = vld [vmem:[#allocation2] sm:$0xff]
            %v1243 = vld [vmem:[#allocation2 + $0x8] sm:$0xff]
            %v1244 = vld [vmem:[%s749] sm:$0xff]
            %v1245 = vld [vmem:[%s749 + $0x8] sm:$0xff]
            %v1246 = vld [vmem:[%s858] sm:$0x1]
            %1248 = vset.pattern.permute.xlu0 0
            %1249 = vperm.xlu0 %1248, %v1244
            %v1250 = vpop.permute.xlu0 %1249
            %1253 = vset.pattern.permute.xlu0 0
            %1254 = vperm.xlu0 %1253, %v1245
            %v1255 = vpop.permute.xlu0 %1254
            %v1258 = vperm.slane %v1246, 0
            %v1260 = vmul.f32 %v1250, %v1258
            %v1261 = vmul.f32 %v1255, %v1258
            %v1262 = vadd.f32 %v1242, %v1260
            %v1263 = vadd.f32 %v1243, %v1261
            %1264 = vst [vmem:[#allocation2] sm:$0xff] %v1262
            %1265 = vst [vmem:[#allocation2 + $0x8] sm:$0xff] %v1263
          $region64: #{tpu_custom_call.1} parent=59 // pred_fallthru
            _
        $region60: #{tpu_custom_call.1} parent=43 // pred_fallthru
          _
        %p1266 = scmp.eq.s32.totalorder %s41, 7
        %p1267 = pnand %p1266, %p877
        %p1268 = pneg %p1267
        // Predicated region
        $region65: #{tpu_custom_call.1} parent=43 // pred_check
          _
        $region66: #{tpu_custom_call.1} parent=43 // pred_check_branch
          %1270 = sbr.rel (%p1267) target = $region68
        $region67: #{tpu_custom_call.1} parent=43 // pred_region
          %v1271 = vld [vmem:[#allocation2] sm:$0xff]
          %v1272 = vld [vmem:[#allocation2 + $0x8] sm:$0xff]
          %1273 = vst [vmem:[#allocation11] sm:$0xff] %v1271
          %1274 = vst [vmem:[#allocation11 + $0x8] sm:$0xff] %v1272
        $region68: #{tpu_custom_call.1} parent=43 // pred_fallthru
          _
        // Predicated region
        $region69: #{tpu_custom_call.1} parent=43 // pred_check
          %p1275 = pneg %p382
        $region70: #{tpu_custom_call.1} parent=43 // pred_check_branch
          %1277 = sbr.rel (%p1275) target = $region72
        $region71: #{tpu_custom_call.1} parent=43 // pred_region
          %s1278 = smul.u32 2, %s40
          %1280 = vsyncadd [#allocation8], 0
          %s1281 = smul.addr %s1278, 8
          %s1282 = scalar_lea.hbm %s8, %s1281
          %s1283 = sshll.u32 [#allocation11], 4
          %s1284 = int_to_ptr.vmem [resolvable:$true] %s1283
          %s1285 = sshll.u32 %s1282, 4
          %s1286 = int_to_ptr.hbm [resolvable:$true] %s1285
          %1291 = dma.vmem_to_hbm [thread:$0]  %s1284, 256, %s1286, [#allocation8], 128, 128, 8
        $region72: #{tpu_custom_call.1} parent=43 // pred_fallthru
          _
        // Predicated region
        $region73: #{tpu_custom_call.1} parent=43 // pred_check
          %p1292 = pneg %p382
        $region74: #{tpu_custom_call.1} parent=43 // pred_check_branch
          %1294 = sbr.rel (%p1292) target = $region76
        $region75: #{tpu_custom_call.1} parent=43 // pred_region
          %1296 = dma.done [#allocation8], 256
        $region76: #{tpu_custom_call.1} parent=43 // pred_fallthru
          _
      $region44: #{tpu_custom_call.1} parent=5 // pred_fallthru
        _
      %p1297 = scmp.le.s32.totalorder 2, %s30
      // Predicated region
      $region77: #{tpu_custom_call.1} parent=5 // pred_check
        %p1298 = pneg %p1297
      $region78: #{tpu_custom_call.1} parent=5 // pred_check_branch
        %1300 = sbr.rel (%p1298) target = $region80
      $region79: #{tpu_custom_call.1} parent=5 // pred_region
        %s1301 = ssub.s32 %s30, 2
      $region80: #{tpu_custom_call.1} parent=5 // pred_fallthru
        _
    $region6: #{tpu_custom_call.1} parent=1 // loop_footer
      %s34 = sadd.s32 1, %s30
    $region7: #{tpu_custom_call.1} parent=1 // loop_footer_branch
      %29 = sbr.rel target = $region3
    $region8: #{tpu_custom_call.1} parent=1 // loop_exit
      _
    %1302 = vsyncpa [#allocation7], 1
    %s1303 = scalar_lea.sflag [#allocation7], 1
    %1304 = vsyncpa %s1303, 1
    %1305 = vsyncpa [#allocation10], 1
    %s1306 = scalar_lea.sflag [#allocation10], 1
    %1307 = vsyncpa %s1306, 1
    %1308 = vsyncpa [#allocation8], 1
    %s1309 = scalar_lea.sflag [#allocation8], 1
    %1310 = vsyncpa %s1309, 1

</llo_original>
